<compile_context>
chip_gen: v7x
topology: tpu7x:2x2x1
jax: 0.10.0
libtpu: 0.0.40
codegen_flags: <defaults>
</compile_context>

<pallas_src>
import math

import jax
import jax.numpy as jnp
from jax.experimental import pallas as pl
from jax.experimental.pallas import tpu as pltpu

D_MODEL = 256
N_HEADS = 8
D_HEAD = D_MODEL // N_HEADS
SCALE = math.sqrt(D_HEAD)


# ---------------------------------------------------------------------------
# Kernel bodies
# ---------------------------------------------------------------------------

def _attention_core(qb, kb, vb, wo_ref, bo_f32, out_ref, ctx_ref):
    """Per-head attention + output projection. qb/kb/vb are (tb, S, D) bf16;
    1/sqrt(d_head) is already folded into qb. ctx_ref is a (tb, S, D) bf16 VMEM scratch."""
    tb, s, d = out_ref.shape

    for h in range(N_HEADS):
        lo = h * D_HEAD
        qh = qb[:, :, lo:lo + D_HEAD]
        kh = kb[:, :, lo:lo + D_HEAD]
        vh = vb[:, :, lo:lo + D_HEAD]

        # (tb, S, S) scores in f32 on the MXU.
        scores = jnp.einsum('bqd,bkd->bqk', qh, kh,
                            preferred_element_type=jnp.float32)

        # Numerically-stable softmax; normalize AFTER the PV matmul (flash style) so the
        # reciprocal scale touches (S, 32) instead of (S, S) elements.
        m = jnp.max(scores, axis=-1, keepdims=True)
        e = jnp.exp(scores - m)
        denom = jnp.sum(e, axis=-1, keepdims=True)

        ctx_h = jnp.einsum('bqk,bkd->bqd', e.astype(jnp.bfloat16), vh,
                           preferred_element_type=jnp.float32)
        ctx_h = ctx_h * pl.reciprocal(denom, approx=True)

        # Write this head's 32-lane slice straight into VMEM scratch (no concat,
        # per-head temporaries die here).
        ctx_ref[:, :, lo:lo + D_HEAD] = ctx_h.astype(jnp.bfloat16)

    ctx = ctx_ref[...].reshape(tb * s, d)
    out = jnp.dot(ctx, wo_ref[...], preferred_element_type=jnp.float32) + bo_f32
    out_ref[...] = out.reshape(tb, s, d).astype(out_ref.dtype)


def _mha_kernel_general(q_in_ref, k_in_ref, v_in_ref,
                        wq_ref, wk_ref, wv_ref, wo_ref, b_ref,
                        out_ref, ctx_ref):
    """Cross-attention path: separate q/k/v activations and projections."""
    tb, s, d = q_in_ref.shape

    def proj(x_ref, w_ref, bias_f32):
        x2 = x_ref[...].reshape(tb * s, d).astype(jnp.bfloat16)
        y = jnp.dot(x2, w_ref[...], preferred_element_type=jnp.float32) + bias_f32
        return y.astype(jnp.bfloat16).reshape(tb, s, d)

    qb = proj(q_in_ref, wq_ref, b_ref[0])   # scale folded into wq / b[0]
    kb = proj(k_in_ref, wk_ref, b_ref[1])
    vb = proj(v_in_ref, wv_ref, b_ref[2])
    _attention_core(qb, kb, vb, wo_ref, b_ref[3], out_ref, ctx_ref)


def _mha_kernel_selfattn(x_in_ref, wqkv_ref, bqkv_ref, wo_ref, bo_ref,
                         out_ref, ctx_ref):
    """Self-attention fast path: one activation block, fused (D, 3D) QKV projection."""
    tb, s, d = x_in_ref.shape
    x2 = x_in_ref[...].reshape(tb * s, d).astype(jnp.bfloat16)
    y = jnp.dot(x2, wqkv_ref[...], preferred_element_type=jnp.float32) + bqkv_ref[0]
    yb = y.astype(jnp.bfloat16).reshape(tb, s, 3 * d)
    qb = yb[:, :, 0:d]
    kb = yb[:, :, d:2 * d]
    vb = yb[:, :, 2 * d:3 * d]
    _attention_core(qb, kb, vb, wo_ref, bo_ref[0], out_ref, ctx_ref)


# ---------------------------------------------------------------------------
# Tiling heuristics (generation-aware)
# ---------------------------------------------------------------------------

def _vmem_capacity_bytes():
    try:
        return int(pltpu.get_tpu_info().vmem_capacity_bytes)
    except Exception:
        return 64 * 1024 * 1024   # conservative (v7x-sized) fallback


def _pick_batch_tile(B, S, n_act_inputs, budget_bytes):
    """Pick tb so tb*S fills the MXU M dimension (>=256 rows) while the double-buffered
    input/output blocks + in-kernel f32/bf16 temporaries fit the VMEM budget, keeping
    >=2 grid steps where that does not starve the M tile (v7x megacore)."""
    # resident weights/biases (assume 2 pipeline buffers even though index_map is const)
    fixed = 2 * (4 * D_MODEL * D_MODEL * 2 + 8 * D_MODEL * 4)
    per_b = (
        S * D_MODEL * 4 * (2 * n_act_inputs + 2)   # 2x-buffered f32 input + output blocks
        + 3 * S * D_MODEL * 4                      # f32 q/k/v projection results
        + 3 * S * D_MODEL * 2                      # bf16 q/k/v copies
        + 4 * S * S * 4                            # per-head f32 scores + exp (x2 headroom)
        + S * D_MODEL * 2                          # bf16 ctx scratch
        + S * D_MODEL * 4                          # f32 output before cast
    )
    vmem_cap = max(1, (budget_bytes - fixed) // per_b)

    target = max(1, -(-512 // S))                  # aim for tb*S ~ 512 (two MXU M tiles)
    tb = max(1, min(B, vmem_cap, target))
    while tb > 1 and B % tb != 0:
        tb -= 1

    if B // tb < 2:                                # try to keep >=2 grid steps
        alt = tb
        while alt > 1 and (B % alt != 0 or B // alt < 2):
            alt -= 1
        if B % alt == 0 and B // alt >= 2 and (alt * S >= 256 or tb * S < 256):
            tb = alt
    return tb


# ---------------------------------------------------------------------------
# Wrapper
# ---------------------------------------------------------------------------

def multi_head_attention(query, key, value, params, *, batch_tile=None,
                         self_attention=None):
    """query/key/value: [B, S, D_MODEL] float32; params: PyTorch-Linear-shaped weights."""
    B, S, D = query.shape
    assert D == D_MODEL
    assert key.shape == query.shape and value.shape == query.shape

    if self_attention is None:
        self_attention = (query is key) and (key is value)

    inv_scale = 1.0 / SCALE
    # Pre-transpose to [in, out], fold the attention scale into Wq/bq, cast to bf16.
    wq_t = (params['wq'].T * inv_scale).astype(jnp.bfloat16)
    wk_t = params['wk'].T.astype(jnp.bfloat16)
    wv_t = params['wv'].T.astype(jnp.bfloat16)
    wo_t = params['wo'].T.astype(jnp.bfloat16)

    vmem_cap = _vmem_capacity_bytes()
    budget = int(vmem_cap * 0.5)          # tile-sizing budget (leave pipeline headroom)
    vmem_limit = int(vmem_cap * 0.7)      # explicit scoped limit handed to Mosaic

    n_act_inputs = 1 if self_attention else 3
    tb = batch_tile if batch_tile is not None else _pick_batch_tile(B, S, n_act_inputs, budget)
    assert B % tb == 0
    grid = (B // tb,)

    seq_spec = pl.BlockSpec((tb, S, D), lambda b: (b, 0, 0))
    w_spec = pl.BlockSpec((D, D), lambda b: (0, 0))

    flops = 2 * B * S * D * D * 4 + 4 * B * S * S * D
    cost = pl.CostEstimate(
        flops=flops,
        transcendentals=B * N_HEADS * S * S,
        bytes_accessed=(n_act_inputs + 1) * B * S * D * 4 + 4 * D * D * 2 + 4 * D * 4,
    )
    compiler_params = pltpu.CompilerParams(
        dimension_semantics=("parallel",),
        vmem_limit_bytes=vmem_limit,
    )
    scratch_shapes = [pltpu.VMEM((tb, S, D), jnp.bfloat16)]
    out_shape = jax.ShapeDtypeStruct((B, S, D), query.dtype)

    if self_attention:
        # Fused QKV projection: one (tb*S, D) @ (D, 3D) matmul, 1/3 the activation DMA.
        wqkv_t = jnp.concatenate([wq_t, wk_t, wv_t], axis=1)                   # (D, 3D)
        bqkv = jnp.concatenate([params['bq'] * inv_scale, params['bk'],
                                params['bv']]).astype(jnp.float32).reshape(1, 3 * D)
        bo = params['bo'].astype(jnp.float32).reshape(1, D)
        return pl.pallas_call(
            _mha_kernel_selfattn,
            out_shape=out_shape,
            grid_spec=pltpu.PrefetchScalarGridSpec(
                num_scalar_prefetch=0,
                grid=grid,
                in_specs=[seq_spec,
                          pl.BlockSpec((D, 3 * D), lambda b: (0, 0)),
                          pl.BlockSpec((1, 3 * D), lambda b: (0, 0)),
                          w_spec,
                          pl.BlockSpec((1, D), lambda b: (0, 0))],
                out_specs=seq_spec,
                scratch_shapes=scratch_shapes,
            ),
            compiler_params=compiler_params,
            cost_estimate=cost,
        )(query, wqkv_t, bqkv, wo_t, bo)

    biases = jnp.stack([params['bq'] * inv_scale, params['bk'],
                        params['bv'], params['bo']]).astype(jnp.float32)       # (4, D)
    return pl.pallas_call(
        _mha_kernel_general,
        out_shape=out_shape,
        grid_spec=pltpu.PrefetchScalarGridSpec(
            num_scalar_prefetch=0,
            grid=grid,
            in_specs=[seq_spec, seq_spec, seq_spec,
                      w_spec, w_spec, w_spec, w_spec,
                      pl.BlockSpec((4, D), lambda b: (0, 0))],
            out_specs=seq_spec,
            scratch_shapes=scratch_shapes,
        ),
        compiler_params=compiler_params,
        cost_estimate=cost,
    )(query, key, value, wq_t, wk_t, wv_t, wo_t, biases)


# ---------------------------------------------------------------------------
# Reference + test
# ---------------------------------------------------------------------------

def _init_params(key):
    """Deterministic PyTorch-Linear-shaped parameters: W is [out, in]."""
    ks = jax.random.split(key, 8)
    bound = 1.0 / math.sqrt(D_MODEL)

    def u(k, shape):
        return jax.random.uniform(k, shape, jnp.float32, -bound, bound)

    return {
        'wq': u(ks[0], (D_MODEL, D_MODEL)), 'bq': u(ks[1], (D_MODEL,)),
        'wk': u(ks[2], (D_MODEL, D_MODEL)), 'bk': u(ks[3], (D_MODEL,)),
        'wv': u(ks[4], (D_MODEL, D_MODEL)), 'bv': u(ks[5], (D_MODEL,)),
        'wo': u(ks[6], (D_MODEL, D_MODEL)), 'bo': u(ks[7], (D_MODEL,)),
    }


def _reference(query, key, value, params):
    """Pure-JAX f32 reference mirroring the PyTorch forward (mask/bias None, no dropout)."""
    B, S, D = query.shape
    q = query @ params['wq'].T + params['bq']
    k = key @ params['wk'].T + params['bk']
    v = value @ params['wv'].T + params['bv']
    q = q.reshape(B, S, N_HEADS, D_HEAD).transpose(0, 2, 1, 3)
    k = k.reshape(B, S, N_HEADS, D_HEAD).transpose(0, 2, 1, 3)
    v = v.reshape(B, S, N_HEADS, D_HEAD).transpose(0, 2, 1, 3)
    scores = jnp.einsum('bhqd,bhkd->bhqk', q, k) / SCALE
    attn = jax.nn.softmax(scores, axis=-1)
    out = jnp.einsum('bhqk,bhkd->bhqd', attn, v)
    out = out.transpose(0, 2, 1, 3).reshape(B, S, D)
    return out @ params['wo'].T + params['bo']


if __name__ == "__main__":
    root = jax.random.PRNGKey(0)
    k_param, k_q, k_k, k_v = jax.random.split(root, 4)

    B, S = 2, 8
    params = _init_params(k_param)
    query = jax.random.normal(k_q, (B, S, D_MODEL), jnp.float32)
    key_t = jax.random.normal(k_k, (B, S, D_MODEL), jnp.float32)
    value = jax.random.normal(k_v, (B, S, D_MODEL), jnp.float32)

    # General (cross-attention) path: q != k != v.
    out = jax.block_until_ready(multi_head_attention(query, key_t, value, params))
    ref = _reference(query, key_t, value, params)
    assert out.shape == (B, S, D_MODEL)
    # bf16 MXU matmuls + approx EUP reciprocal => ~1e-3..1e-2 relative drift vs f32 ref.
    assert jnp.allclose(out, ref, atol=2e-2, rtol=2e-2), "mismatch vs reference (general)"

    # Self-attention fast path: fused QKV projection, single activation input.
    out_sa = jax.block_until_ready(multi_head_attention(query, query, query, params))
    ref_sa = _reference(query, query, query, params)
    assert jnp.allclose(out_sa, ref_sa, atol=2e-2, rtol=2e-2), "mismatch vs reference (self-attn)"

    print("KERNEL_OK")
</pallas_src>

<mosaic_0001>
module attributes {stable_mosaic.version = 11 : i64} {
  func.func @_mha_kernel_general(%arg0: i32, %arg1: memref<1x8x256xf32, #tpu.memory_space<vmem>>, %arg2: memref<1x8x256xf32, #tpu.memory_space<vmem>>, %arg3: memref<1x8x256xf32, #tpu.memory_space<vmem>>, %arg4: memref<256x256xbf16, #tpu.memory_space<vmem>>, %arg5: memref<256x256xbf16, #tpu.memory_space<vmem>>, %arg6: memref<256x256xbf16, #tpu.memory_space<vmem>>, %arg7: memref<256x256xbf16, #tpu.memory_space<vmem>>, %arg8: memref<4x256xf32, #tpu.memory_space<vmem>>, %arg9: memref<1x8x256xf32, #tpu.memory_space<vmem>>, %arg10: memref<1x8x256xbf16, #tpu.memory_space<vmem>>) attributes {dimension_semantics = [#tpu.dimension_semantics<parallel>], iteration_bounds = array<i64: 2>, scalar_prefetch = 0 : i64, scratch_operands = 1 : i64, tpu.core_type = #tpu.core_type<tc>, window_params = [{transform_indices = @transform_0, window_bounds = array<i64: 1, 8, 256>}, {transform_indices = @transform_1, window_bounds = array<i64: 1, 8, 256>}, {transform_indices = @transform_2, window_bounds = array<i64: 1, 8, 256>}, {pipeline_mode = #tpu.pipeline_mode<synchronous>, transform_indices = @transform_3, window_bounds = array<i64: 256, 256>}, {pipeline_mode = #tpu.pipeline_mode<synchronous>, transform_indices = @transform_4, window_bounds = array<i64: 256, 256>}, {pipeline_mode = #tpu.pipeline_mode<synchronous>, transform_indices = @transform_5, window_bounds = array<i64: 256, 256>}, {pipeline_mode = #tpu.pipeline_mode<synchronous>, transform_indices = @transform_6, window_bounds = array<i64: 256, 256>}, {pipeline_mode = #tpu.pipeline_mode<synchronous>, transform_indices = @transform_7, window_bounds = array<i64: 4, 256>}, {transform_indices = @transform_8, window_bounds = array<i64: 1, 8, 256>}]} {
    %c0 = arith.constant 0 : index
    %c0_0 = arith.constant 0 : index
    %0 = vector.load %arg8[%c0, %c0_0] : memref<4x256xf32, #tpu.memory_space<vmem>>, vector<1x256xf32>
    %1 = vector.shape_cast %0 : vector<1x256xf32> to vector<256xf32>
    %c0_1 = arith.constant 0 : index
    %c0_2 = arith.constant 0 : index
    %c0_3 = arith.constant 0 : index
    %2 = vector.load %arg1[%c0_1, %c0_2, %c0_3] : memref<1x8x256xf32, #tpu.memory_space<vmem>>, vector<1x8x256xf32>
    %3 = vector.shape_cast %2 : vector<1x8x256xf32> to vector<8x256xf32>
    %4 = arith.truncf %3 : vector<8x256xf32> to vector<8x256xbf16>
    %c0_4 = arith.constant 0 : index
    %c0_5 = arith.constant 0 : index
    %5 = vector.load %arg4[%c0_4, %c0_5] : memref<256x256xbf16, #tpu.memory_space<vmem>>, vector<256x256xbf16>
    %cst = arith.constant dense<0.000000e+00> : vector<8x256xf32>
    %6 = tpu.matmul %4, %5, %cst {dimension_numbers = #tpu.dot_dimension_numbers<[1], [0], [0], [1], [0, 0, 1, 1], [], []>} : vector<8x256xbf16>, vector<256x256xbf16>, vector<8x256xf32> -> vector<8x256xf32>
    %7 = vector.shape_cast %1 : vector<256xf32> to vector<1x256xf32>
    %8 = vector.broadcast %7 : vector<1x256xf32> to vector<8x256xf32>
    %9 = arith.addf %6, %8 : vector<8x256xf32>
    %10 = arith.truncf %9 : vector<8x256xf32> to vector<8x256xbf16>
    %11 = vector.shape_cast %10 : vector<8x256xbf16> to vector<1x8x256xbf16>
    %c1 = arith.constant 1 : index
    %c0_6 = arith.constant 0 : index
    %12 = vector.load %arg8[%c1, %c0_6] : memref<4x256xf32, #tpu.memory_space<vmem>>, vector<1x256xf32>
    %13 = vector.shape_cast %12 : vector<1x256xf32> to vector<256xf32>
    %c0_7 = arith.constant 0 : index
    %c0_8 = arith.constant 0 : index
    %c0_9 = arith.constant 0 : index
    %14 = vector.load %arg2[%c0_7, %c0_8, %c0_9] : memref<1x8x256xf32, #tpu.memory_space<vmem>>, vector<1x8x256xf32>
    %15 = vector.shape_cast %14 : vector<1x8x256xf32> to vector<8x256xf32>
    %16 = arith.truncf %15 : vector<8x256xf32> to vector<8x256xbf16>
    %c0_10 = arith.constant 0 : index
    %c0_11 = arith.constant 0 : index
    %17 = vector.load %arg5[%c0_10, %c0_11] : memref<256x256xbf16, #tpu.memory_space<vmem>>, vector<256x256xbf16>
    %cst_12 = arith.constant dense<0.000000e+00> : vector<8x256xf32>
    %18 = tpu.matmul %16, %17, %cst_12 {dimension_numbers = #tpu.dot_dimension_numbers<[1], [0], [0], [1], [0, 0, 1, 1], [], []>} : vector<8x256xbf16>, vector<256x256xbf16>, vector<8x256xf32> -> vector<8x256xf32>
    %19 = vector.shape_cast %13 : vector<256xf32> to vector<1x256xf32>
    %20 = vector.broadcast %19 : vector<1x256xf32> to vector<8x256xf32>
    %21 = arith.addf %18, %20 : vector<8x256xf32>
    %22 = arith.truncf %21 : vector<8x256xf32> to vector<8x256xbf16>
    %23 = vector.shape_cast %22 : vector<8x256xbf16> to vector<1x8x256xbf16>
    %c2 = arith.constant 2 : index
    %c0_13 = arith.constant 0 : index
    %24 = vector.load %arg8[%c2, %c0_13] : memref<4x256xf32, #tpu.memory_space<vmem>>, vector<1x256xf32>
    %25 = vector.shape_cast %24 : vector<1x256xf32> to vector<256xf32>
    %c0_14 = arith.constant 0 : index
    %c0_15 = arith.constant 0 : index
    %c0_16 = arith.constant 0 : index
    %26 = vector.load %arg3[%c0_14, %c0_15, %c0_16] : memref<1x8x256xf32, #tpu.memory_space<vmem>>, vector<1x8x256xf32>
    %27 = vector.shape_cast %26 : vector<1x8x256xf32> to vector<8x256xf32>
    %28 = arith.truncf %27 : vector<8x256xf32> to vector<8x256xbf16>
    %c0_17 = arith.constant 0 : index
    %c0_18 = arith.constant 0 : index
    %29 = vector.load %arg6[%c0_17, %c0_18] : memref<256x256xbf16, #tpu.memory_space<vmem>>, vector<256x256xbf16>
    %cst_19 = arith.constant dense<0.000000e+00> : vector<8x256xf32>
    %30 = tpu.matmul %28, %29, %cst_19 {dimension_numbers = #tpu.dot_dimension_numbers<[1], [0], [0], [1], [0, 0, 1, 1], [], []>} : vector<8x256xbf16>, vector<256x256xbf16>, vector<8x256xf32> -> vector<8x256xf32>
    %31 = vector.shape_cast %25 : vector<256xf32> to vector<1x256xf32>
    %32 = vector.broadcast %31 : vector<1x256xf32> to vector<8x256xf32>
    %33 = arith.addf %30, %32 : vector<8x256xf32>
    %34 = arith.truncf %33 : vector<8x256xf32> to vector<8x256xbf16>
    %35 = vector.shape_cast %34 : vector<8x256xbf16> to vector<1x8x256xbf16>
    %c3 = arith.constant 3 : index
    %c0_20 = arith.constant 0 : index
    %36 = vector.load %arg8[%c3, %c0_20] : memref<4x256xf32, #tpu.memory_space<vmem>>, vector<1x256xf32>
    %37 = vector.shape_cast %36 : vector<1x256xf32> to vector<256xf32>
    %38 = vector.extract_strided_slice %11 {offsets = [0, 0, 0], sizes = [1, 8, 32], strides = [1, 1, 1]} : vector<1x8x256xbf16> to vector<1x8x32xbf16>
    %39 = vector.extract_strided_slice %23 {offsets = [0, 0, 0], sizes = [1, 8, 32], strides = [1, 1, 1]} : vector<1x8x256xbf16> to vector<1x8x32xbf16>
    %40 = vector.extract_strided_slice %35 {offsets = [0, 0, 0], sizes = [1, 8, 32], strides = [1, 1, 1]} : vector<1x8x256xbf16> to vector<1x8x32xbf16>
    "tpu.trace_start"() <{level = 10 : i32, message = "bqd,bkd->bqk"}> : () -> ()
    %cst_21 = arith.constant dense<0.000000e+00> : vector<1x8x8xf32>
    %41 = tpu.matmul %38, %39, %cst_21 {dimension_numbers = #tpu.dot_dimension_numbers<[2], [2], [1], [1], [0, 0, 0, 1, 1, 1], [0], [0]>} : vector<1x8x32xbf16>, vector<1x8x32xbf16>, vector<1x8x8xf32> -> vector<1x8x8xf32>
    "tpu.trace_stop"() : () -> ()
    %cst_22 = arith.constant dense<0xFF800000> : vector<1x8xf32>
    %42 = vector.multi_reduction <maximumf>, %41, %cst_22 [2] : vector<1x8x8xf32> to vector<1x8xf32>
    %43 = vector.shape_cast %42 : vector<1x8xf32> to vector<1x8x1xf32>
    %44 = vector.broadcast %43 : vector<1x8x1xf32> to vector<1x8x8xf32>
    %45 = arith.subf %41, %44 : vector<1x8x8xf32>
    %46 = math.exp %45 : vector<1x8x8xf32>
    %cst_23 = arith.constant dense<0.000000e+00> : vector<1x8xf32>
    %47 = vector.multi_reduction <add>, %46, %cst_23 [2] : vector<1x8x8xf32> to vector<1x8xf32>
    %48 = vector.shape_cast %47 : vector<1x8xf32> to vector<1x8x1xf32>
    %49 = arith.truncf %46 : vector<1x8x8xf32> to vector<1x8x8xbf16>
    "tpu.trace_start"() <{level = 10 : i32, message = "bqk,bkd->bqd"}> : () -> ()
    %cst_24 = arith.constant dense<0.000000e+00> : vector<1x8x32xf32>
    %50 = tpu.matmul %49, %40, %cst_24 {dimension_numbers = #tpu.dot_dimension_numbers<[2], [1], [1], [2], [0, 0, 0, 1, 1, 2], [0], [0]>} : vector<1x8x8xbf16>, vector<1x8x32xbf16>, vector<1x8x32xf32> -> vector<1x8x32xf32>
    "tpu.trace_stop"() : () -> ()
    %51 = tpu.reciprocal %48 {approx = true} : vector<1x8x1xf32> -> vector<1x8x1xf32>
    %52 = vector.broadcast %51 : vector<1x8x1xf32> to vector<1x8x32xf32>
    %53 = arith.mulf %50, %52 : vector<1x8x32xf32>
    %54 = arith.truncf %53 : vector<1x8x32xf32> to vector<1x8x32xbf16>
    %c0_25 = arith.constant 0 : index
    %c0_26 = arith.constant 0 : index
    %c0_27 = arith.constant 0 : index
    %55 = vector.load %arg10[%c0_25, %c0_26, %c0_27] : memref<1x8x256xbf16, #tpu.memory_space<vmem>>, vector<1x8x32xbf16>
    tpu.vector_store %arg10[%c0_25, %c0_26, %c0_27], %54 {strides = array<i32>} : memref<1x8x256xbf16, #tpu.memory_space<vmem>>, vector<1x8x32xbf16>,
    %56 = vector.extract_strided_slice %11 {offsets = [0, 0, 32], sizes = [1, 8, 32], strides = [1, 1, 1]} : vector<1x8x256xbf16> to vector<1x8x32xbf16>
    %57 = vector.extract_strided_slice %23 {offsets = [0, 0, 32], sizes = [1, 8, 32], strides = [1, 1, 1]} : vector<1x8x256xbf16> to vector<1x8x32xbf16>
    %58 = vector.extract_strided_slice %35 {offsets = [0, 0, 32], sizes = [1, 8, 32], strides = [1, 1, 1]} : vector<1x8x256xbf16> to vector<1x8x32xbf16>
    "tpu.trace_start"() <{level = 10 : i32, message = "bqd,bkd->bqk"}> : () -> ()
    %cst_28 = arith.constant dense<0.000000e+00> : vector<1x8x8xf32>
    %59 = tpu.matmul %56, %57, %cst_28 {dimension_numbers = #tpu.dot_dimension_numbers<[2], [2], [1], [1], [0, 0, 0, 1, 1, 1], [0], [0]>} : vector<1x8x32xbf16>, vector<1x8x32xbf16>, vector<1x8x8xf32> -> vector<1x8x8xf32>
    "tpu.trace_stop"() : () -> ()
    %cst_29 = arith.constant dense<0xFF800000> : vector<1x8xf32>
    %60 = vector.multi_reduction <maximumf>, %59, %cst_29 [2] : vector<1x8x8xf32> to vector<1x8xf32>
    %61 = vector.shape_cast %60 : vector<1x8xf32> to vector<1x8x1xf32>
    %62 = vector.broadcast %61 : vector<1x8x1xf32> to vector<1x8x8xf32>
    %63 = arith.subf %59, %62 : vector<1x8x8xf32>
    %64 = math.exp %63 : vector<1x8x8xf32>
    %cst_30 = arith.constant dense<0.000000e+00> : vector<1x8xf32>
    %65 = vector.multi_reduction <add>, %64, %cst_30 [2] : vector<1x8x8xf32> to vector<1x8xf32>
    %66 = vector.shape_cast %65 : vector<1x8xf32> to vector<1x8x1xf32>
    %67 = arith.truncf %64 : vector<1x8x8xf32> to vector<1x8x8xbf16>
    "tpu.trace_start"() <{level = 10 : i32, message = "bqk,bkd->bqd"}> : () -> ()
    %cst_31 = arith.constant dense<0.000000e+00> : vector<1x8x32xf32>
    %68 = tpu.matmul %67, %58, %cst_31 {dimension_numbers = #tpu.dot_dimension_numbers<[2], [1], [1], [2], [0, 0, 0, 1, 1, 2], [0], [0]>} : vector<1x8x8xbf16>, vector<1x8x32xbf16>, vector<1x8x32xf32> -> vector<1x8x32xf32>
    "tpu.trace_stop"() : () -> ()
    %69 = tpu.reciprocal %66 {approx = true} : vector<1x8x1xf32> -> vector<1x8x1xf32>
    %70 = vector.broadcast %69 : vector<1x8x1xf32> to vector<1x8x32xf32>
    %71 = arith.mulf %68, %70 : vector<1x8x32xf32>
    %72 = arith.truncf %71 : vector<1x8x32xf32> to vector<1x8x32xbf16>
    %c0_32 = arith.constant 0 : index
    %c0_33 = arith.constant 0 : index
    %c32 = arith.constant 32 : index
    %73 = vector.load %arg10[%c0_32, %c0_33, %c32] : memref<1x8x256xbf16, #tpu.memory_space<vmem>>, vector<1x8x32xbf16>
    tpu.vector_store %arg10[%c0_32, %c0_33, %c32], %72 {strides = array<i32>} : memref<1x8x256xbf16, #tpu.memory_space<vmem>>, vector<1x8x32xbf16>,
    %74 = vector.extract_strided_slice %11 {offsets = [0, 0, 64], sizes = [1, 8, 32], strides = [1, 1, 1]} : vector<1x8x256xbf16> to vector<1x8x32xbf16>
    %75 = vector.extract_strided_slice %23 {offsets = [0, 0, 64], sizes = [1, 8, 32], strides = [1, 1, 1]} : vector<1x8x256xbf16> to vector<1x8x32xbf16>
    %76 = vector.extract_strided_slice %35 {offsets = [0, 0, 64], sizes = [1, 8, 32], strides = [1, 1, 1]} : vector<1x8x256xbf16> to vector<1x8x32xbf16>
    "tpu.trace_start"() <{level = 10 : i32, message = "bqd,bkd->bqk"}> : () -> ()
    %cst_34 = arith.constant dense<0.000000e+00> : vector<1x8x8xf32>
    %77 = tpu.matmul %74, %75, %cst_34 {dimension_numbers = #tpu.dot_dimension_numbers<[2], [2], [1], [1], [0, 0, 0, 1, 1, 1], [0], [0]>} : vector<1x8x32xbf16>, vector<1x8x32xbf16>, vector<1x8x8xf32> -> vector<1x8x8xf32>
    "tpu.trace_stop"() : () -> ()
    %cst_35 = arith.constant dense<0xFF800000> : vector<1x8xf32>
    %78 = vector.multi_reduction <maximumf>, %77, %cst_35 [2] : vector<1x8x8xf32> to vector<1x8xf32>
    %79 = vector.shape_cast %78 : vector<1x8xf32> to vector<1x8x1xf32>
    %80 = vector.broadcast %79 : vector<1x8x1xf32> to vector<1x8x8xf32>
    %81 = arith.subf %77, %80 : vector<1x8x8xf32>
    %82 = math.exp %81 : vector<1x8x8xf32>
    %cst_36 = arith.constant dense<0.000000e+00> : vector<1x8xf32>
    %83 = vector.multi_reduction <add>, %82, %cst_36 [2] : vector<1x8x8xf32> to vector<1x8xf32>
    %84 = vector.shape_cast %83 : vector<1x8xf32> to vector<1x8x1xf32>
    %85 = arith.truncf %82 : vector<1x8x8xf32> to vector<1x8x8xbf16>
    "tpu.trace_start"() <{level = 10 : i32, message = "bqk,bkd->bqd"}> : () -> ()
    %cst_37 = arith.constant dense<0.000000e+00> : vector<1x8x32xf32>
    %86 = tpu.matmul %85, %76, %cst_37 {dimension_numbers = #tpu.dot_dimension_numbers<[2], [1], [1], [2], [0, 0, 0, 1, 1, 2], [0], [0]>} : vector<1x8x8xbf16>, vector<1x8x32xbf16>, vector<1x8x32xf32> -> vector<1x8x32xf32>
    "tpu.trace_stop"() : () -> ()
    %87 = tpu.reciprocal %84 {approx = true} : vector<1x8x1xf32> -> vector<1x8x1xf32>
    %88 = vector.broadcast %87 : vector<1x8x1xf32> to vector<1x8x32xf32>
    %89 = arith.mulf %86, %88 : vector<1x8x32xf32>
    %90 = arith.truncf %89 : vector<1x8x32xf32> to vector<1x8x32xbf16>
    %c0_38 = arith.constant 0 : index
    %c0_39 = arith.constant 0 : index
    %c64 = arith.constant 64 : index
    %91 = vector.load %arg10[%c0_38, %c0_39, %c64] : memref<1x8x256xbf16, #tpu.memory_space<vmem>>, vector<1x8x32xbf16>
    tpu.vector_store %arg10[%c0_38, %c0_39, %c64], %90 {strides = array<i32>} : memref<1x8x256xbf16, #tpu.memory_space<vmem>>, vector<1x8x32xbf16>,
    %92 = vector.extract_strided_slice %11 {offsets = [0, 0, 96], sizes = [1, 8, 32], strides = [1, 1, 1]} : vector<1x8x256xbf16> to vector<1x8x32xbf16>
    %93 = vector.extract_strided_slice %23 {offsets = [0, 0, 96], sizes = [1, 8, 32], strides = [1, 1, 1]} : vector<1x8x256xbf16> to vector<1x8x32xbf16>
    %94 = vector.extract_strided_slice %35 {offsets = [0, 0, 96], sizes = [1, 8, 32], strides = [1, 1, 1]} : vector<1x8x256xbf16> to vector<1x8x32xbf16>
    "tpu.trace_start"() <{level = 10 : i32, message = "bqd,bkd->bqk"}> : () -> ()
    %cst_40 = arith.constant dense<0.000000e+00> : vector<1x8x8xf32>
    %95 = tpu.matmul %92, %93, %cst_40 {dimension_numbers = #tpu.dot_dimension_numbers<[2], [2], [1], [1], [0, 0, 0, 1, 1, 1], [0], [0]>} : vector<1x8x32xbf16>, vector<1x8x32xbf16>, vector<1x8x8xf32> -> vector<1x8x8xf32>
    "tpu.trace_stop"() : () -> ()
    %cst_41 = arith.constant dense<0xFF800000> : vector<1x8xf32>
    %96 = vector.multi_reduction <maximumf>, %95, %cst_41 [2] : vector<1x8x8xf32> to vector<1x8xf32>
    %97 = vector.shape_cast %96 : vector<1x8xf32> to vector<1x8x1xf32>
    %98 = vector.broadcast %97 : vector<1x8x1xf32> to vector<1x8x8xf32>
    %99 = arith.subf %95, %98 : vector<1x8x8xf32>
    %100 = math.exp %99 : vector<1x8x8xf32>
    %cst_42 = arith.constant dense<0.000000e+00> : vector<1x8xf32>
    %101 = vector.multi_reduction <add>, %100, %cst_42 [2] : vector<1x8x8xf32> to vector<1x8xf32>
    %102 = vector.shape_cast %101 : vector<1x8xf32> to vector<1x8x1xf32>
    %103 = arith.truncf %100 : vector<1x8x8xf32> to vector<1x8x8xbf16>
    "tpu.trace_start"() <{level = 10 : i32, message = "bqk,bkd->bqd"}> : () -> ()
    %cst_43 = arith.constant dense<0.000000e+00> : vector<1x8x32xf32>
    %104 = tpu.matmul %103, %94, %cst_43 {dimension_numbers = #tpu.dot_dimension_numbers<[2], [1], [1], [2], [0, 0, 0, 1, 1, 2], [0], [0]>} : vector<1x8x8xbf16>, vector<1x8x32xbf16>, vector<1x8x32xf32> -> vector<1x8x32xf32>
    "tpu.trace_stop"() : () -> ()
    %105 = tpu.reciprocal %102 {approx = true} : vector<1x8x1xf32> -> vector<1x8x1xf32>
    %106 = vector.broadcast %105 : vector<1x8x1xf32> to vector<1x8x32xf32>
    %107 = arith.mulf %104, %106 : vector<1x8x32xf32>
    %108 = arith.truncf %107 : vector<1x8x32xf32> to vector<1x8x32xbf16>
    %c0_44 = arith.constant 0 : index
    %c0_45 = arith.constant 0 : index
    %c96 = arith.constant 96 : index
    %109 = vector.load %arg10[%c0_44, %c0_45, %c96] : memref<1x8x256xbf16, #tpu.memory_space<vmem>>, vector<1x8x32xbf16>
    tpu.vector_store %arg10[%c0_44, %c0_45, %c96], %108 {strides = array<i32>} : memref<1x8x256xbf16, #tpu.memory_space<vmem>>, vector<1x8x32xbf16>,
    %110 = vector.extract_strided_slice %11 {offsets = [0, 0, 128], sizes = [1, 8, 32], strides = [1, 1, 1]} : vector<1x8x256xbf16> to vector<1x8x32xbf16>
    %111 = vector.extract_strided_slice %23 {offsets = [0, 0, 128], sizes = [1, 8, 32], strides = [1, 1, 1]} : vector<1x8x256xbf16> to vector<1x8x32xbf16>
    %112 = vector.extract_strided_slice %35 {offsets = [0, 0, 128], sizes = [1, 8, 32], strides = [1, 1, 1]} : vector<1x8x256xbf16> to vector<1x8x32xbf16>
    "tpu.trace_start"() <{level = 10 : i32, message = "bqd,bkd->bqk"}> : () -> ()
    %cst_46 = arith.constant dense<0.000000e+00> : vector<1x8x8xf32>
    %113 = tpu.matmul %110, %111, %cst_46 {dimension_numbers = #tpu.dot_dimension_numbers<[2], [2], [1], [1], [0, 0, 0, 1, 1, 1], [0], [0]>} : vector<1x8x32xbf16>, vector<1x8x32xbf16>, vector<1x8x8xf32> -> vector<1x8x8xf32>
    "tpu.trace_stop"() : () -> ()
    %cst_47 = arith.constant dense<0xFF800000> : vector<1x8xf32>
    %114 = vector.multi_reduction <maximumf>, %113, %cst_47 [2] : vector<1x8x8xf32> to vector<1x8xf32>
    %115 = vector.shape_cast %114 : vector<1x8xf32> to vector<1x8x1xf32>
    %116 = vector.broadcast %115 : vector<1x8x1xf32> to vector<1x8x8xf32>
    %117 = arith.subf %113, %116 : vector<1x8x8xf32>
    %118 = math.exp %117 : vector<1x8x8xf32>
    %cst_48 = arith.constant dense<0.000000e+00> : vector<1x8xf32>
    %119 = vector.multi_reduction <add>, %118, %cst_48 [2] : vector<1x8x8xf32> to vector<1x8xf32>
    %120 = vector.shape_cast %119 : vector<1x8xf32> to vector<1x8x1xf32>
    %121 = arith.truncf %118 : vector<1x8x8xf32> to vector<1x8x8xbf16>
    "tpu.trace_start"() <{level = 10 : i32, message = "bqk,bkd->bqd"}> : () -> ()
    %cst_49 = arith.constant dense<0.000000e+00> : vector<1x8x32xf32>
    %122 = tpu.matmul %121, %112, %cst_49 {dimension_numbers = #tpu.dot_dimension_numbers<[2], [1], [1], [2], [0, 0, 0, 1, 1, 2], [0], [0]>} : vector<1x8x8xbf16>, vector<1x8x32xbf16>, vector<1x8x32xf32> -> vector<1x8x32xf32>
    "tpu.trace_stop"() : () -> ()
    %123 = tpu.reciprocal %120 {approx = true} : vector<1x8x1xf32> -> vector<1x8x1xf32>
    %124 = vector.broadcast %123 : vector<1x8x1xf32> to vector<1x8x32xf32>
    %125 = arith.mulf %122, %124 : vector<1x8x32xf32>
    %126 = arith.truncf %125 : vector<1x8x32xf32> to vector<1x8x32xbf16>
    %c0_50 = arith.constant 0 : index
    %c0_51 = arith.constant 0 : index
    %c128 = arith.constant 128 : index
    %127 = vector.load %arg10[%c0_50, %c0_51, %c128] : memref<1x8x256xbf16, #tpu.memory_space<vmem>>, vector<1x8x32xbf16>
    tpu.vector_store %arg10[%c0_50, %c0_51, %c128], %126 {strides = array<i32>} : memref<1x8x256xbf16, #tpu.memory_space<vmem>>, vector<1x8x32xbf16>,
    %128 = vector.extract_strided_slice %11 {offsets = [0, 0, 160], sizes = [1, 8, 32], strides = [1, 1, 1]} : vector<1x8x256xbf16> to vector<1x8x32xbf16>
    %129 = vector.extract_strided_slice %23 {offsets = [0, 0, 160], sizes = [1, 8, 32], strides = [1, 1, 1]} : vector<1x8x256xbf16> to vector<1x8x32xbf16>
    %130 = vector.extract_strided_slice %35 {offsets = [0, 0, 160], sizes = [1, 8, 32], strides = [1, 1, 1]} : vector<1x8x256xbf16> to vector<1x8x32xbf16>
    "tpu.trace_start"() <{level = 10 : i32, message = "bqd,bkd->bqk"}> : () -> ()
    %cst_52 = arith.constant dense<0.000000e+00> : vector<1x8x8xf32>
    %131 = tpu.matmul %128, %129, %cst_52 {dimension_numbers = #tpu.dot_dimension_numbers<[2], [2], [1], [1], [0, 0, 0, 1, 1, 1], [0], [0]>} : vector<1x8x32xbf16>, vector<1x8x32xbf16>, vector<1x8x8xf32> -> vector<1x8x8xf32>
    "tpu.trace_stop"() : () -> ()
    %cst_53 = arith.constant dense<0xFF800000> : vector<1x8xf32>
    %132 = vector.multi_reduction <maximumf>, %131, %cst_53 [2] : vector<1x8x8xf32> to vector<1x8xf32>
    %133 = vector.shape_cast %132 : vector<1x8xf32> to vector<1x8x1xf32>
    %134 = vector.broadcast %133 : vector<1x8x1xf32> to vector<1x8x8xf32>
    %135 = arith.subf %131, %134 : vector<1x8x8xf32>
    %136 = math.exp %135 : vector<1x8x8xf32>
    %cst_54 = arith.constant dense<0.000000e+00> : vector<1x8xf32>
    %137 = vector.multi_reduction <add>, %136, %cst_54 [2] : vector<1x8x8xf32> to vector<1x8xf32>
    %138 = vector.shape_cast %137 : vector<1x8xf32> to vector<1x8x1xf32>
    %139 = arith.truncf %136 : vector<1x8x8xf32> to vector<1x8x8xbf16>
    "tpu.trace_start"() <{level = 10 : i32, message = "bqk,bkd->bqd"}> : () -> ()
    %cst_55 = arith.constant dense<0.000000e+00> : vector<1x8x32xf32>
    %140 = tpu.matmul %139, %130, %cst_55 {dimension_numbers = #tpu.dot_dimension_numbers<[2], [1], [1], [2], [0, 0, 0, 1, 1, 2], [0], [0]>} : vector<1x8x8xbf16>, vector<1x8x32xbf16>, vector<1x8x32xf32> -> vector<1x8x32xf32>
    "tpu.trace_stop"() : () -> ()
    %141 = tpu.reciprocal %138 {approx = true} : vector<1x8x1xf32> -> vector<1x8x1xf32>
    %142 = vector.broadcast %141 : vector<1x8x1xf32> to vector<1x8x32xf32>
    %143 = arith.mulf %140, %142 : vector<1x8x32xf32>
    %144 = arith.truncf %143 : vector<1x8x32xf32> to vector<1x8x32xbf16>
    %c0_56 = arith.constant 0 : index
    %c0_57 = arith.constant 0 : index
    %c160 = arith.constant 160 : index
    %145 = vector.load %arg10[%c0_56, %c0_57, %c160] : memref<1x8x256xbf16, #tpu.memory_space<vmem>>, vector<1x8x32xbf16>
    tpu.vector_store %arg10[%c0_56, %c0_57, %c160], %144 {strides = array<i32>} : memref<1x8x256xbf16, #tpu.memory_space<vmem>>, vector<1x8x32xbf16>,
    %146 = vector.extract_strided_slice %11 {offsets = [0, 0, 192], sizes = [1, 8, 32], strides = [1, 1, 1]} : vector<1x8x256xbf16> to vector<1x8x32xbf16>
    %147 = vector.extract_strided_slice %23 {offsets = [0, 0, 192], sizes = [1, 8, 32], strides = [1, 1, 1]} : vector<1x8x256xbf16> to vector<1x8x32xbf16>
    %148 = vector.extract_strided_slice %35 {offsets = [0, 0, 192], sizes = [1, 8, 32], strides = [1, 1, 1]} : vector<1x8x256xbf16> to vector<1x8x32xbf16>
    "tpu.trace_start"() <{level = 10 : i32, message = "bqd,bkd->bqk"}> : () -> ()
    %cst_58 = arith.constant dense<0.000000e+00> : vector<1x8x8xf32>
    %149 = tpu.matmul %146, %147, %cst_58 {dimension_numbers = #tpu.dot_dimension_numbers<[2], [2], [1], [1], [0, 0, 0, 1, 1, 1], [0], [0]>} : vector<1x8x32xbf16>, vector<1x8x32xbf16>, vector<1x8x8xf32> -> vector<1x8x8xf32>
    "tpu.trace_stop"() : () -> ()
    %cst_59 = arith.constant dense<0xFF800000> : vector<1x8xf32>
    %150 = vector.multi_reduction <maximumf>, %149, %cst_59 [2] : vector<1x8x8xf32> to vector<1x8xf32>
    %151 = vector.shape_cast %150 : vector<1x8xf32> to vector<1x8x1xf32>
    %152 = vector.broadcast %151 : vector<1x8x1xf32> to vector<1x8x8xf32>
    %153 = arith.subf %149, %152 : vector<1x8x8xf32>
    %154 = math.exp %153 : vector<1x8x8xf32>
    %cst_60 = arith.constant dense<0.000000e+00> : vector<1x8xf32>
    %155 = vector.multi_reduction <add>, %154, %cst_60 [2] : vector<1x8x8xf32> to vector<1x8xf32>
    %156 = vector.shape_cast %155 : vector<1x8xf32> to vector<1x8x1xf32>
    %157 = arith.truncf %154 : vector<1x8x8xf32> to vector<1x8x8xbf16>
    "tpu.trace_start"() <{level = 10 : i32, message = "bqk,bkd->bqd"}> : () -> ()
    %cst_61 = arith.constant dense<0.000000e+00> : vector<1x8x32xf32>
    %158 = tpu.matmul %157, %148, %cst_61 {dimension_numbers = #tpu.dot_dimension_numbers<[2], [1], [1], [2], [0, 0, 0, 1, 1, 2], [0], [0]>} : vector<1x8x8xbf16>, vector<1x8x32xbf16>, vector<1x8x32xf32> -> vector<1x8x32xf32>
    "tpu.trace_stop"() : () -> ()
    %159 = tpu.reciprocal %156 {approx = true} : vector<1x8x1xf32> -> vector<1x8x1xf32>
    %160 = vector.broadcast %159 : vector<1x8x1xf32> to vector<1x8x32xf32>
    %161 = arith.mulf %158, %160 : vector<1x8x32xf32>
    %162 = arith.truncf %161 : vector<1x8x32xf32> to vector<1x8x32xbf16>
    %c0_62 = arith.constant 0 : index
    %c0_63 = arith.constant 0 : index
    %c192 = arith.constant 192 : index
    %163 = vector.load %arg10[%c0_62, %c0_63, %c192] : memref<1x8x256xbf16, #tpu.memory_space<vmem>>, vector<1x8x32xbf16>
    tpu.vector_store %arg10[%c0_62, %c0_63, %c192], %162 {strides = array<i32>} : memref<1x8x256xbf16, #tpu.memory_space<vmem>>, vector<1x8x32xbf16>,
    %164 = vector.extract_strided_slice %11 {offsets = [0, 0, 224], sizes = [1, 8, 32], strides = [1, 1, 1]} : vector<1x8x256xbf16> to vector<1x8x32xbf16>
    %165 = vector.extract_strided_slice %23 {offsets = [0, 0, 224], sizes = [1, 8, 32], strides = [1, 1, 1]} : vector<1x8x256xbf16> to vector<1x8x32xbf16>
    %166 = vector.extract_strided_slice %35 {offsets = [0, 0, 224], sizes = [1, 8, 32], strides = [1, 1, 1]} : vector<1x8x256xbf16> to vector<1x8x32xbf16>
    "tpu.trace_start"() <{level = 10 : i32, message = "bqd,bkd->bqk"}> : () -> ()
    %cst_64 = arith.constant dense<0.000000e+00> : vector<1x8x8xf32>
    %167 = tpu.matmul %164, %165, %cst_64 {dimension_numbers = #tpu.dot_dimension_numbers<[2], [2], [1], [1], [0, 0, 0, 1, 1, 1], [0], [0]>} : vector<1x8x32xbf16>, vector<1x8x32xbf16>, vector<1x8x8xf32> -> vector<1x8x8xf32>
    "tpu.trace_stop"() : () -> ()
    %cst_65 = arith.constant dense<0xFF800000> : vector<1x8xf32>
    %168 = vector.multi_reduction <maximumf>, %167, %cst_65 [2] : vector<1x8x8xf32> to vector<1x8xf32>
    %169 = vector.shape_cast %168 : vector<1x8xf32> to vector<1x8x1xf32>
    %170 = vector.broadcast %169 : vector<1x8x1xf32> to vector<1x8x8xf32>
    %171 = arith.subf %167, %170 : vector<1x8x8xf32>
    %172 = math.exp %171 : vector<1x8x8xf32>
    %cst_66 = arith.constant dense<0.000000e+00> : vector<1x8xf32>
    %173 = vector.multi_reduction <add>, %172, %cst_66 [2] : vector<1x8x8xf32> to vector<1x8xf32>
    %174 = vector.shape_cast %173 : vector<1x8xf32> to vector<1x8x1xf32>
    %175 = arith.truncf %172 : vector<1x8x8xf32> to vector<1x8x8xbf16>
    "tpu.trace_start"() <{level = 10 : i32, message = "bqk,bkd->bqd"}> : () -> ()
    %cst_67 = arith.constant dense<0.000000e+00> : vector<1x8x32xf32>
    %176 = tpu.matmul %175, %166, %cst_67 {dimension_numbers = #tpu.dot_dimension_numbers<[2], [1], [1], [2], [0, 0, 0, 1, 1, 2], [0], [0]>} : vector<1x8x8xbf16>, vector<1x8x32xbf16>, vector<1x8x32xf32> -> vector<1x8x32xf32>
    "tpu.trace_stop"() : () -> ()
    %177 = tpu.reciprocal %174 {approx = true} : vector<1x8x1xf32> -> vector<1x8x1xf32>
    %178 = vector.broadcast %177 : vector<1x8x1xf32> to vector<1x8x32xf32>
    %179 = arith.mulf %176, %178 : vector<1x8x32xf32>
    %180 = arith.truncf %179 : vector<1x8x32xf32> to vector<1x8x32xbf16>
    %c0_68 = arith.constant 0 : index
    %c0_69 = arith.constant 0 : index
    %c224 = arith.constant 224 : index
    %181 = vector.load %arg10[%c0_68, %c0_69, %c224] : memref<1x8x256xbf16, #tpu.memory_space<vmem>>, vector<1x8x32xbf16>
    tpu.vector_store %arg10[%c0_68, %c0_69, %c224], %180 {strides = array<i32>} : memref<1x8x256xbf16, #tpu.memory_space<vmem>>, vector<1x8x32xbf16>,
    %c0_70 = arith.constant 0 : index
    %c0_71 = arith.constant 0 : index
    %c0_72 = arith.constant 0 : index
    %182 = vector.load %arg10[%c0_70, %c0_71, %c0_72] : memref<1x8x256xbf16, #tpu.memory_space<vmem>>, vector<1x8x256xbf16>
    %183 = vector.shape_cast %182 : vector<1x8x256xbf16> to vector<8x256xbf16>
    %c0_73 = arith.constant 0 : index
    %c0_74 = arith.constant 0 : index
    %184 = vector.load %arg7[%c0_73, %c0_74] : memref<256x256xbf16, #tpu.memory_space<vmem>>, vector<256x256xbf16>
    %cst_75 = arith.constant dense<0.000000e+00> : vector<8x256xf32>
    %185 = tpu.matmul %183, %184, %cst_75 {dimension_numbers = #tpu.dot_dimension_numbers<[1], [0], [0], [1], [0, 0, 1, 1], [], []>} : vector<8x256xbf16>, vector<256x256xbf16>, vector<8x256xf32> -> vector<8x256xf32>
    %186 = vector.shape_cast %37 : vector<256xf32> to vector<1x256xf32>
    %187 = vector.broadcast %186 : vector<1x256xf32> to vector<8x256xf32>
    %188 = arith.addf %185, %187 : vector<8x256xf32>
    %189 = vector.shape_cast %188 : vector<8x256xf32> to vector<1x8x256xf32>
    %c0_76 = arith.constant 0 : index
    %c0_77 = arith.constant 0 : index
    %c0_78 = arith.constant 0 : index
    %190 = vector.load %arg9[%c0_76, %c0_77, %c0_78] : memref<1x8x256xf32, #tpu.memory_space<vmem>>, vector<1x8x256xf32>
    tpu.vector_store %arg9[%c0_76, %c0_77, %c0_78], %189 {strides = array<i32>} : memref<1x8x256xf32, #tpu.memory_space<vmem>>, vector<1x8x256xf32>,
    return
  }
  func.func @transform_0(%arg0: i32) -> (i32, i32, i32) {
    %c0_i32 = arith.constant 0 : i32
    %c0_i32_0 = arith.constant 0 : i32
    %c0_i32_1 = arith.constant 0 : i32
    return %arg0, %c0_i32, %c0_i32_0 : i32, i32, i32
  }
  func.func @transform_1(%arg0: i32) -> (i32, i32, i32) {
    %c0_i32 = arith.constant 0 : i32
    %c0_i32_0 = arith.constant 0 : i32
    %c0_i32_1 = arith.constant 0 : i32
    return %arg0, %c0_i32, %c0_i32_0 : i32, i32, i32
  }
  func.func @transform_2(%arg0: i32) -> (i32, i32, i32) {
    %c0_i32 = arith.constant 0 : i32
    %c0_i32_0 = arith.constant 0 : i32
    %c0_i32_1 = arith.constant 0 : i32
    return %arg0, %c0_i32, %c0_i32_0 : i32, i32, i32
  }
  func.func @transform_3(%arg0: i32) -> (i32, i32) {
    %c0_i32 = arith.constant 0 : i32
    %c0_i32_0 = arith.constant 0 : i32
    %c0_i32_1 = arith.constant 0 : i32
    return %c0_i32, %c0_i32_0 : i32, i32
  }
  func.func @transform_4(%arg0: i32) -> (i32, i32) {
    %c0_i32 = arith.constant 0 : i32
    %c0_i32_0 = arith.constant 0 : i32
    %c0_i32_1 = arith.constant 0 : i32
    return %c0_i32, %c0_i32_0 : i32, i32
  }
  func.func @transform_5(%arg0: i32) -> (i32, i32) {
    %c0_i32 = arith.constant 0 : i32
    %c0_i32_0 = arith.constant 0 : i32
    %c0_i32_1 = arith.constant 0 : i32
    return %c0_i32, %c0_i32_0 : i32, i32
  }
  func.func @transform_6(%arg0: i32) -> (i32, i32) {
    %c0_i32 = arith.constant 0 : i32
    %c0_i32_0 = arith.constant 0 : i32
    %c0_i32_1 = arith.constant 0 : i32
    return %c0_i32, %c0_i32_0 : i32, i32
  }
  func.func @transform_7(%arg0: i32) -> (i32, i32) {
    %c0_i32 = arith.constant 0 : i32
    %c0_i32_0 = arith.constant 0 : i32
    %c0_i32_1 = arith.constant 0 : i32
    return %c0_i32, %c0_i32_0 : i32, i32
  }
  func.func @transform_8(%arg0: i32) -> (i32, i32, i32) {
    %c0_i32 = arith.constant 0 : i32
    %c0_i32_0 = arith.constant 0 : i32
    %c0_i32_1 = arith.constant 0 : i32
    return %arg0, %c0_i32, %c0_i32_0 : i32, i32, i32
  }
}

</mosaic_0001>

<llo_original>
// kernel: tpu_custom_call.1
$region0: #{tpu_custom_call.1}
  #allocation0 [shape = 'u32[]', space=smem, size = 0x4, offset = 0x4, fixed_abs, tag = 'smem constant byte address 0x4 - core index']
  #allocation1 [shape = 'u32[144,128]{1,0:T(1,128)}', space=vmem, size = 0x12000, scoped, tag = 'internal scratch']
  #allocation2 [shape = 'bf16[1,8,256]{2,1,0:T(8,128)(2,1)}', space=vmem, size = 0x1000, scoped, tag = 'scratch operand']
  %s0 = inlined_call_operand.hbm [shape: f32[2,8,256], index: 0, kind: input, shape index: {}]
  %s1 = inlined_call_operand.hbm [shape: f32[2,8,256], index: 1, kind: input, shape index: {}]
  %s2 = inlined_call_operand.hbm [shape: f32[2,8,256], index: 2, kind: input, shape index: {}]
  %s3 = inlined_call_operand.hbm [shape: bf16[256,256], index: 3, kind: input, shape index: {}]
  %s4 = inlined_call_operand.hbm [shape: bf16[256,256], index: 4, kind: input, shape index: {}]
  %s5 = inlined_call_operand.hbm [shape: bf16[256,256], index: 5, kind: input, shape index: {}]
  %s6 = inlined_call_operand.hbm [shape: bf16[256,256], index: 6, kind: input, shape index: {}]
  %s7 = inlined_call_operand.vmem [shape: f32[4,256], index: 7, kind: input, shape index: {}]
  %s8 = inlined_call_operand.hbm [shape: f32[2,8,256], index: 8, kind: output, shape index: {}]
  %s9 = sld [smem:[#allocation0]]
  $region93: #{tpu_custom_call.1} parent=0
    _
  %s11 = ssub.s32 1, %s9
  %s12 = scalar_select 0, %s11, %s9
  $region1: #{tpu_custom_call.1} parent=0
    #allocation3 [shape = 'u8[16384]{0}', space=vmem, size = 0x4000, scoped, tag = 'input window, operand 0']
    #allocation4 [shape = 's32[2]{0}', space=sflag, size = 0x8, scoped, tag = 'scoped memory for tpu_custom_call.1']
    #allocation5 [shape = 's32[2]{0}', space=sflag, size = 0x8, scoped, tag = 'scoped memory for tpu_custom_call.1']
    #allocation6 [shape = 'u8[16384]{0}', space=vmem, size = 0x4000, scoped, tag = 'input window, operand 1']
    #allocation7 [shape = 's32[2]{0}', space=sflag, size = 0x8, scoped, tag = 'scoped memory for tpu_custom_call.1']
    #allocation8 [shape = 'u8[16384]{0}', space=vmem, size = 0x4000, scoped, tag = 'input window, operand 2']
    #allocation9 [shape = 'u8[131072]{0}', space=vmem, size = 0x20000, scoped, tag = 'input window, operand 3, single buffered']
    #allocation10 [shape = 's32[1]{0}', space=sflag, size = 0x4, scoped, tag = 'scoped memory for tpu_custom_call.1']
    #allocation11 [shape = 'u8[131072]{0}', space=vmem, size = 0x20000, scoped, tag = 'input window, operand 4, single buffered']
    #allocation12 [shape = 'u8[131072]{0}', space=vmem, size = 0x20000, scoped, tag = 'input window, operand 5, single buffered']
    #allocation13 [shape = 's32[1]{0}', space=sflag, size = 0x4, scoped, tag = 'scoped memory for tpu_custom_call.1']
    #allocation14 [shape = 'u8[131072]{0}', space=vmem, size = 0x20000, scoped, tag = 'input window, operand 6, single buffered']
    #allocation15 [shape = 'u8[16384]{0}', space=vmem, size = 0x4000, scoped, tag = 'output window, operand 0']
    %13 = vsyncpa [#allocation4], 0
    %s14 = scalar_lea.sflag [#allocation4], 1
    %15 = vsyncpa %s14, 0
    %16 = vsyncpa [#allocation7], 0
    %s17 = scalar_lea.sflag [#allocation7], 1
    %18 = vsyncpa %s17, 0
    %19 = vsyncpa [#allocation10], 0
    %20 = vsyncpa [#allocation13], 0
    %21 = vsyncpa [#allocation5], 0
    %s22 = scalar_lea.sflag [#allocation5], 1
    %23 = vsyncpa %s22, 0
    loop: start=0, step=1, limit=4
    $region2: #{tpu_custom_call.1} parent=1 // loop_pre_header
      _
    $region3: #{tpu_custom_call.1} parent=1 // loop_header
      %s25 = sphi 0, %s29
      %p26 = scmp.ge.s32.totalorder %s25, 4
      %s35 = sphi 0, %s37
      %s38 = sphi 0, %s35
      %s39 = sphi 0, %s38
      %s55 = sphi 0, %s39
      %s61 = sphi 0, %s63
      %s64 = sphi 0, %s61
      %s65 = sphi 0, %s64
      %s81 = sphi 0, %s65
      %s87 = sphi 0, %s89
      %s90 = sphi 0, %s87
      %s91 = sphi 0, %s90
      %s107 = sphi 0, %s91
      %s111 = sphi 0, %s111
      %s113 = sphi 0, %s111
      %s114 = sphi 0, %s113
      %s128 = sphi 0, %s114
      %s132 = sphi 0, %s132
      %s134 = sphi 0, %s132
      %s135 = sphi 0, %s134
      %s149 = sphi 0, %s135
      %s153 = sphi 0, %s153
      %s155 = sphi 0, %s153
      %s156 = sphi 0, %s155
      %s170 = sphi 0, %s156
      %s174 = sphi 0, %s174
      %s176 = sphi 0, %s174
      %s177 = sphi 0, %s176
      %s191 = sphi 0, %s177
      %s195 = sphi 0, %s195
      %s197 = sphi 0, %s195
      %s198 = sphi 0, %s197
      %s212 = sphi 0, %s198
      %s218 = sphi 0, %s220
      %s221 = sphi 0, %s218
      %s222 = sphi 0, %s221
      %s238 = sphi 0, %s222
    $region4: #{tpu_custom_call.1} parent=1 // loop_header_branch
      %28 = sbr.rel (%p26) target = $region8
    $region5: #{tpu_custom_call.1} parent=1 // loop_body
      %s30 = ssub.s32 %s25, 1
      %s31 = ssub.s32 %s25, 2
      %s32 = sadd.s32 %s25, 1
      %s33 = ssub.s32 %s25, %s32
      %p34 = scmp.eq.s32.totalorder %s33, 0
      %s36 = sadd.s32 %s35, 1
      %s37 = scalar_select %p34, %s35, %s36
      %p40 = pneg %p34
      %p41 = scmp.eq.s32.totalorder %s25, 1
      %p42 = por %p40, %p41
      %p43 = scmp.ne.s32.totalorder %s35, %s38
      %p44 = scmp.eq.s32.totalorder %s25, 0
      %p45 = por %p43, %p44
      %p46 = scmp.ne.s32.totalorder %s35, %s38
      %p47 = scmp.eq.s32.totalorder %s30, 1
      %p48 = por %p46, %p47
      %p49 = scmp.ne.s32.totalorder %s38, %s39
      %p50 = scmp.eq.s32.totalorder %s30, 0
      %p51 = por %p49, %p50
      %p52 = scmp.ne.s32.totalorder %s38, %s39
      %p53 = scmp.eq.s32.totalorder %s31, 1
      %p54 = por %p52, %p53
      %p56 = scmp.ne.s32.totalorder %s39, %s55
      %p57 = scmp.eq.s32.totalorder %s31, 0
      %p58 = por %p56, %p57
      %s59 = ssub.s32 %s25, %s32
      %p60 = scmp.eq.s32.totalorder %s59, 0
      %s62 = sadd.s32 %s61, 1
      %s63 = scalar_select %p60, %s61, %s62
      %p66 = pneg %p60
      %p67 = scmp.eq.s32.totalorder %s25, 1
      %p68 = por %p66, %p67
      %p69 = scmp.ne.s32.totalorder %s61, %s64
      %p70 = scmp.eq.s32.totalorder %s25, 0
      %p71 = por %p69, %p70
      %p72 = scmp.ne.s32.totalorder %s61, %s64
      %p73 = scmp.eq.s32.totalorder %s30, 1
      %p74 = por %p72, %p73
      %p75 = scmp.ne.s32.totalorder %s64, %s65
      %p76 = scmp.eq.s32.totalorder %s30, 0
      %p77 = por %p75, %p76
      %p78 = scmp.ne.s32.totalorder %s64, %s65
      %p79 = scmp.eq.s32.totalorder %s31, 1
      %p80 = por %p78, %p79
      %p82 = scmp.ne.s32.totalorder %s65, %s81
      %p83 = scmp.eq.s32.totalorder %s31, 0
      %p84 = por %p82, %p83
      %s85 = ssub.s32 %s25, %s32
      %p86 = scmp.eq.s32.totalorder %s85, 0
      %s88 = sadd.s32 %s87, 1
      %s89 = scalar_select %p86, %s87, %s88
      %p92 = pneg %p86
      %p93 = scmp.eq.s32.totalorder %s25, 1
      %p94 = por %p92, %p93
      %p95 = scmp.ne.s32.totalorder %s87, %s90
      %p96 = scmp.eq.s32.totalorder %s25, 0
      %p97 = por %p95, %p96
      %p98 = scmp.ne.s32.totalorder %s87, %s90
      %p99 = scmp.eq.s32.totalorder %s30, 1
      %p100 = por %p98, %p99
      %p101 = scmp.ne.s32.totalorder %s90, %s91
      %p102 = scmp.eq.s32.totalorder %s30, 0
      %p103 = por %p101, %p102
      %p104 = scmp.ne.s32.totalorder %s90, %s91
      %p105 = scmp.eq.s32.totalorder %s31, 1
      %p106 = por %p104, %p105
      %p108 = scmp.ne.s32.totalorder %s91, %s107
      %p109 = scmp.eq.s32.totalorder %s31, 0
      %p110 = por %p108, %p109
      %s112 = sadd.s32 %s111, 1
      %p115 = scmp.eq.s32.totalorder %s25, 1
      %p116 = scmp.ne.s32.totalorder %s111, %s113
      %p117 = scmp.eq.s32.totalorder %s25, 0
      %p118 = por %p116, %p117
      %p119 = scmp.ne.s32.totalorder %s111, %s113
      %p120 = scmp.eq.s32.totalorder %s30, 1
      %p121 = por %p119, %p120
      %p122 = scmp.ne.s32.totalorder %s113, %s114
      %p123 = scmp.eq.s32.totalorder %s30, 0
      %p124 = por %p122, %p123
      %p125 = scmp.ne.s32.totalorder %s113, %s114
      %p126 = scmp.eq.s32.totalorder %s31, 1
      %p127 = por %p125, %p126
      %p129 = scmp.ne.s32.totalorder %s114, %s128
      %p130 = scmp.eq.s32.totalorder %s31, 0
      %p131 = por %p129, %p130
      %s133 = sadd.s32 %s132, 1
      %p136 = scmp.eq.s32.totalorder %s25, 1
      %p137 = scmp.ne.s32.totalorder %s132, %s134
      %p138 = scmp.eq.s32.totalorder %s25, 0
      %p139 = por %p137, %p138
      %p140 = scmp.ne.s32.totalorder %s132, %s134
      %p141 = scmp.eq.s32.totalorder %s30, 1
      %p142 = por %p140, %p141
      %p143 = scmp.ne.s32.totalorder %s134, %s135
      %p144 = scmp.eq.s32.totalorder %s30, 0
      %p145 = por %p143, %p144
      %p146 = scmp.ne.s32.totalorder %s134, %s135
      %p147 = scmp.eq.s32.totalorder %s31, 1
      %p148 = por %p146, %p147
      %p150 = scmp.ne.s32.totalorder %s135, %s149
      %p151 = scmp.eq.s32.totalorder %s31, 0
      %p152 = por %p150, %p151
      %s154 = sadd.s32 %s153, 1
      %p157 = scmp.eq.s32.totalorder %s25, 1
      %p158 = scmp.ne.s32.totalorder %s153, %s155
      %p159 = scmp.eq.s32.totalorder %s25, 0
      %p160 = por %p158, %p159
      %p161 = scmp.ne.s32.totalorder %s153, %s155
      %p162 = scmp.eq.s32.totalorder %s30, 1
      %p163 = por %p161, %p162
      %p164 = scmp.ne.s32.totalorder %s155, %s156
      %p165 = scmp.eq.s32.totalorder %s30, 0
      %p166 = por %p164, %p165
      %p167 = scmp.ne.s32.totalorder %s155, %s156
      %p168 = scmp.eq.s32.totalorder %s31, 1
      %p169 = por %p167, %p168
      %p171 = scmp.ne.s32.totalorder %s156, %s170
      %p172 = scmp.eq.s32.totalorder %s31, 0
      %p173 = por %p171, %p172
      %s175 = sadd.s32 %s174, 1
      %p178 = scmp.eq.s32.totalorder %s25, 1
      %p179 = scmp.ne.s32.totalorder %s174, %s176
      %p180 = scmp.eq.s32.totalorder %s25, 0
      %p181 = por %p179, %p180
      %p182 = scmp.ne.s32.totalorder %s174, %s176
      %p183 = scmp.eq.s32.totalorder %s30, 1
      %p184 = por %p182, %p183
      %p185 = scmp.ne.s32.totalorder %s176, %s177
      %p186 = scmp.eq.s32.totalorder %s30, 0
      %p187 = por %p185, %p186
      %p188 = scmp.ne.s32.totalorder %s176, %s177
      %p189 = scmp.eq.s32.totalorder %s31, 1
      %p190 = por %p188, %p189
      %p192 = scmp.ne.s32.totalorder %s177, %s191
      %p193 = scmp.eq.s32.totalorder %s31, 0
      %p194 = por %p192, %p193
      %s196 = sadd.s32 %s195, 1
      %p199 = scmp.eq.s32.totalorder %s25, 1
      %p200 = scmp.ne.s32.totalorder %s195, %s197
      %p201 = scmp.eq.s32.totalorder %s25, 0
      %p202 = por %p200, %p201
      %p203 = scmp.ne.s32.totalorder %s195, %s197
      %p204 = scmp.eq.s32.totalorder %s30, 1
      %p205 = por %p203, %p204
      %p206 = scmp.ne.s32.totalorder %s197, %s198
      %p207 = scmp.eq.s32.totalorder %s30, 0
      %p208 = por %p206, %p207
      %p209 = scmp.ne.s32.totalorder %s197, %s198
      %p210 = scmp.eq.s32.totalorder %s31, 1
      %p211 = por %p209, %p210
      %p213 = scmp.ne.s32.totalorder %s198, %s212
      %p214 = scmp.eq.s32.totalorder %s31, 0
      %p215 = por %p213, %p214
      %s216 = ssub.s32 %s25, %s32
      %p217 = scmp.eq.s32.totalorder %s216, 0
      %s219 = sadd.s32 %s218, 1
      %s220 = scalar_select %p217, %s218, %s219
      %p223 = pneg %p217
      %p224 = scmp.eq.s32.totalorder %s25, 1
      %p225 = por %p223, %p224
      %p226 = scmp.ne.s32.totalorder %s218, %s221
      %p227 = scmp.eq.s32.totalorder %s25, 0
      %p228 = por %p226, %p227
      %p229 = scmp.ne.s32.totalorder %s218, %s221
      %p230 = scmp.eq.s32.totalorder %s30, 1
      %p231 = por %p229, %p230
      %p232 = scmp.ne.s32.totalorder %s221, %s222
      %p233 = scmp.eq.s32.totalorder %s30, 0
      %p234 = por %p232, %p233
      %p235 = scmp.ne.s32.totalorder %s221, %s222
      %p236 = scmp.eq.s32.totalorder %s31, 1
      %p237 = por %p235, %p236
      %p239 = scmp.ne.s32.totalorder %s222, %s238
      %p240 = scmp.eq.s32.totalorder %s31, 0
      %p241 = por %p239, %p240
      %p242 = scmp.le.s32.totalorder 1, %s25
      %p243 = scmp.lt.s32.totalorder %s25, 3
      %p244 = pnand %p242, %p243
      %p245 = pneg %p244
      // Predicated region
      $region9: #{tpu_custom_call.1} parent=5 // pred_check
        _
      $region10: #{tpu_custom_call.1} parent=5 // pred_check_branch
        %247 = sbr.rel (%p244) target = $region12
      $region11: #{tpu_custom_call.1} parent=5 // pred_region
        %s248 = ssub.s32 %s25, 1
        // Predicated region
        $region13: #{tpu_custom_call.1} parent=11 // pred_check
          %p249 = pneg %p124
        $region14: #{tpu_custom_call.1} parent=11 // pred_check_branch
          %251 = sbr.rel (%p249) target = $region16
        $region15: #{tpu_custom_call.1} parent=11 // pred_region
          %s253 = ssub.s32 4096, 4096
          %254 = vsyncadd [#allocation10], %s253
          %s255 = sshll.u32 [#allocation9], 4
          %s256 = int_to_ptr.vmem [resolvable:$true] %s255
          %261 = dma.hbm_to_vmem [thread:$0]  %s3, 4096, %s256, [#allocation10], 128, 128, 8
        $region16: #{tpu_custom_call.1} parent=11 // pred_fallthru
          _
        // Predicated region
        $region17: #{tpu_custom_call.1} parent=11 // pred_check
          %p262 = pneg %p145
        $region18: #{tpu_custom_call.1} parent=11 // pred_check_branch
          %264 = sbr.rel (%p262) target = $region20
        $region19: #{tpu_custom_call.1} parent=11 // pred_region
          %s266 = ssub.s32 4096, 4096
          %267 = vsyncadd [#allocation10], %s266
          %s268 = sshll.u32 [#allocation11], 4
          %s269 = int_to_ptr.vmem [resolvable:$true] %s268
          %274 = dma.hbm_to_vmem [thread:$0]  %s4, 4096, %s269, [#allocation10], 128, 128, 8
        $region20: #{tpu_custom_call.1} parent=11 // pred_fallthru
          _
        // Predicated region
        $region21: #{tpu_custom_call.1} parent=11 // pred_check
          %p275 = pneg %p166
        $region22: #{tpu_custom_call.1} parent=11 // pred_check_branch
          %277 = sbr.rel (%p275) target = $region24
        $region23: #{tpu_custom_call.1} parent=11 // pred_region
          %s279 = ssub.s32 4096, 4096
          %280 = vsyncadd [#allocation13], %s279
          %s281 = sshll.u32 [#allocation12], 4
          %s282 = int_to_ptr.vmem [resolvable:$true] %s281
          %287 = dma.hbm_to_vmem [thread:$0]  %s5, 4096, %s282, [#allocation13], 128, 128, 8
        $region24: #{tpu_custom_call.1} parent=11 // pred_fallthru
          _
        // Predicated region
        $region25: #{tpu_custom_call.1} parent=11 // pred_check
          %p288 = pneg %p187
        $region26: #{tpu_custom_call.1} parent=11 // pred_check_branch
          %290 = sbr.rel (%p288) target = $region28
        $region27: #{tpu_custom_call.1} parent=11 // pred_region
          %s292 = ssub.s32 4096, 4096
          %293 = vsyncadd [#allocation13], %s292
          %s294 = sshll.u32 [#allocation14], 4
          %s295 = int_to_ptr.vmem [resolvable:$true] %s294
          %300 = dma.hbm_to_vmem [thread:$0]  %s6, 4096, %s295, [#allocation13], 128, 128, 8
        $region28: #{tpu_custom_call.1} parent=11 // pred_fallthru
          _
        // Predicated region
        $region29: #{tpu_custom_call.1} parent=11 // pred_check
          %p301 = pneg %p208
        $region30: #{tpu_custom_call.1} parent=11 // pred_check_branch
          %303 = sbr.rel (%p301) target = $region32
        $region31: #{tpu_custom_call.1} parent=11 // pred_region
          _
        $region32: #{tpu_custom_call.1} parent=11 // pred_fallthru
          _
      $region12: #{tpu_custom_call.1} parent=5 // pred_fallthru
        _
      %p304 = scmp.lt.s32.totalorder %s25, 2
      // Predicated region
      $region33: #{tpu_custom_call.1} parent=5 // pred_check
        %p305 = pneg %p304
      $region34: #{tpu_custom_call.1} parent=5 // pred_check_branch
        %307 = sbr.rel (%p305) target = $region36
      $region35: #{tpu_custom_call.1} parent=5 // pred_region
        // Predicated region
        $region37: #{tpu_custom_call.1} parent=35 // pred_check
          %p308 = pneg %p45
        $region38: #{tpu_custom_call.1} parent=35 // pred_check_branch
          %310 = sbr.rel (%p308) target = $region40
        $region39: #{tpu_custom_call.1} parent=35 // pred_region
          %s311 = sand.u32 %s35, 1
          %s312 = scalar_lea.sflag [#allocation4], %s311
          %s313 = sand.u32 %s35, 1
          %s314 = smul.addr %s313, 16
          %s315 = scalar_lea.vmem [#allocation3], %s314
          %s317 = ssub.s32 256, 256
          %318 = vsyncadd %s312, %s317
          %s319 = smul.addr %s25, 2
          %s320 = smul.addr %s319, 128
          %s321 = scalar_lea.hbm %s0, %s320
          %s323 = sshll.u32 %s315, 4
          %s324 = int_to_ptr.vmem [resolvable:$true] %s323
          %326 = dma.hbm_to_vmem [thread:$0]  %s321, 256, %s324, %s312
        $region40: #{tpu_custom_call.1} parent=35 // pred_fallthru
          _
        // Predicated region
        $region41: #{tpu_custom_call.1} parent=35 // pred_check
          %p327 = pneg %p71
        $region42: #{tpu_custom_call.1} parent=35 // pred_check_branch
          %329 = sbr.rel (%p327) target = $region44
        $region43: #{tpu_custom_call.1} parent=35 // pred_region
          %s330 = sand.u32 %s25, 1
          %s331 = scalar_lea.sflag [#allocation7], %s330
          %s332 = sand.u32 %s61, 1
          %s333 = smul.addr %s332, 16
          %s334 = scalar_lea.vmem [#allocation6], %s333
          %s336 = ssub.s32 256, 256
          %337 = vsyncadd %s331, %s336
          %s338 = smul.addr %s25, 2
          %s339 = smul.addr %s338, 128
          %s340 = scalar_lea.hbm %s1, %s339
          %s342 = sshll.u32 %s334, 4
          %s343 = int_to_ptr.vmem [resolvable:$true] %s342
          %345 = dma.hbm_to_vmem [thread:$0]  %s340, 256, %s343, %s331
        $region44: #{tpu_custom_call.1} parent=35 // pred_fallthru
          _
        // Predicated region
        $region45: #{tpu_custom_call.1} parent=35 // pred_check
          %p346 = pneg %p97
        $region46: #{tpu_custom_call.1} parent=35 // pred_check_branch
          %348 = sbr.rel (%p346) target = $region48
        $region47: #{tpu_custom_call.1} parent=35 // pred_region
          %s349 = sand.u32 %s25, 1
          %s350 = scalar_lea.sflag [#allocation7], %s349
          %s351 = sand.u32 %s87, 1
          %s352 = smul.addr %s351, 16
          %s353 = scalar_lea.vmem [#allocation8], %s352
          %s355 = ssub.s32 256, 256
          %356 = vsyncadd %s350, %s355
          %s357 = smul.addr %s25, 2
          %s358 = smul.addr %s357, 128
          %s359 = scalar_lea.hbm %s2, %s358
          %s361 = sshll.u32 %s353, 4
          %s362 = int_to_ptr.vmem [resolvable:$true] %s361
          %364 = dma.hbm_to_vmem [thread:$0]  %s359, 256, %s362, %s350
        $region48: #{tpu_custom_call.1} parent=35 // pred_fallthru
          _
      $region36: #{tpu_custom_call.1} parent=5 // pred_fallthru
        _
      %p365 = scmp.le.s32.totalorder 1, %s25
      %p366 = scmp.lt.s32.totalorder %s25, 3
      %p367 = pnand %p365, %p366
      %p368 = pneg %p367
      // Predicated region
      $region49: #{tpu_custom_call.1} parent=5 // pred_check
        _
      $region50: #{tpu_custom_call.1} parent=5 // pred_check_branch
        %370 = sbr.rel (%p367) target = $region52
      $region51: #{tpu_custom_call.1} parent=5 // pred_region
        %s371 = ssub.s32 %s25, 1
        %s372 = sand.u32 %s38, 1
        %s373 = scalar_lea.sflag [#allocation4], %s372
        %s374 = sand.u32 %s38, 1
        %s375 = smul.addr %s374, 16
        %s376 = scalar_lea.vmem [#allocation3], %s375
        // Predicated region
        $region53: #{tpu_custom_call.1} parent=51 // pred_check
          %p377 = pneg %p51
        $region54: #{tpu_custom_call.1} parent=51 // pred_check_branch
          %379 = sbr.rel (%p377) target = $region56
        $region55: #{tpu_custom_call.1} parent=51 // pred_region
          %380 = dma.done %s373, 256
        $region56: #{tpu_custom_call.1} parent=51 // pred_fallthru
          _
        %s381 = sand.u32 %s30, 1
        %s382 = scalar_lea.sflag [#allocation7], %s381
        %s383 = sand.u32 %s64, 1
        %s384 = smul.addr %s383, 16
        %s385 = scalar_lea.vmem [#allocation6], %s384
        // Predicated region
        $region57: #{tpu_custom_call.1} parent=51 // pred_check
          %p386 = pneg %p77
        $region58: #{tpu_custom_call.1} parent=51 // pred_check_branch
          %388 = sbr.rel (%p386) target = $region60
        $region59: #{tpu_custom_call.1} parent=51 // pred_region
          %389 = dma.done %s382, 256
        $region60: #{tpu_custom_call.1} parent=51 // pred_fallthru
          _
        %s390 = sand.u32 %s30, 1
        %s391 = scalar_lea.sflag [#allocation7], %s390
        %s392 = sand.u32 %s90, 1
        %s393 = smul.addr %s392, 16
        %s394 = scalar_lea.vmem [#allocation8], %s393
        // Predicated region
        $region61: #{tpu_custom_call.1} parent=51 // pred_check
          %p395 = pneg %p103
        $region62: #{tpu_custom_call.1} parent=51 // pred_check_branch
          %397 = sbr.rel (%p395) target = $region64
        $region63: #{tpu_custom_call.1} parent=51 // pred_region
          %398 = dma.done %s391, 256
        $region64: #{tpu_custom_call.1} parent=51 // pred_fallthru
          _
        // Predicated region
        $region65: #{tpu_custom_call.1} parent=51 // pred_check
          %p399 = pneg %p124
        $region66: #{tpu_custom_call.1} parent=51 // pred_check_branch
          %401 = sbr.rel (%p399) target = $region68
        $region67: #{tpu_custom_call.1} parent=51 // pred_region
          %402 = dma.done [#allocation10], 4096
        $region68: #{tpu_custom_call.1} parent=51 // pred_fallthru
          _
        // Predicated region
        $region69: #{tpu_custom_call.1} parent=51 // pred_check
          %p403 = pneg %p145
        $region70: #{tpu_custom_call.1} parent=51 // pred_check_branch
          %405 = sbr.rel (%p403) target = $region72
        $region71: #{tpu_custom_call.1} parent=51 // pred_region
          %406 = dma.done [#allocation10], 4096
        $region72: #{tpu_custom_call.1} parent=51 // pred_fallthru
          _
        // Predicated region
        $region73: #{tpu_custom_call.1} parent=51 // pred_check
          %p407 = pneg %p166
        $region74: #{tpu_custom_call.1} parent=51 // pred_check_branch
          %409 = sbr.rel (%p407) target = $region76
        $region75: #{tpu_custom_call.1} parent=51 // pred_region
          %410 = dma.done [#allocation13], 4096
        $region76: #{tpu_custom_call.1} parent=51 // pred_fallthru
          _
        // Predicated region
        $region77: #{tpu_custom_call.1} parent=51 // pred_check
          %p411 = pneg %p187
        $region78: #{tpu_custom_call.1} parent=51 // pred_check_branch
          %413 = sbr.rel (%p411) target = $region80
        $region79: #{tpu_custom_call.1} parent=51 // pred_region
          %414 = dma.done [#allocation13], 4096
        $region80: #{tpu_custom_call.1} parent=51 // pred_fallthru
          _
        %s415 = sand.u32 %s38, 1
        %s416 = scalar_lea.sflag [#allocation4], %s415
        %s417 = sand.u32 %s38, 1
        %s418 = smul.addr %s417, 16
        %s419 = scalar_lea.vmem [#allocation3], %s418
        %p420 = pneg %p51
        %p421 = pneg %p48
        %s422 = sand.u32 %s30, 1
        %s423 = scalar_lea.sflag [#allocation7], %s422
        %s424 = sand.u32 %s64, 1
        %s425 = smul.addr %s424, 16
        %s426 = scalar_lea.vmem [#allocation6], %s425
        %p427 = pneg %p77
        %p428 = pneg %p74
        %s429 = sand.u32 %s30, 1
        %s430 = scalar_lea.sflag [#allocation7], %s429
        %s431 = sand.u32 %s90, 1
        %s432 = smul.addr %s431, 16
        %s433 = scalar_lea.vmem [#allocation8], %s432
        %p434 = pneg %p103
        %p435 = pneg %p100
        %p436 = pneg %p124
        %p437 = pneg %p121
        %p438 = pneg %p145
        %p439 = pneg %p142
        %p440 = pneg %p166
        %p441 = pneg %p163
        %p442 = pneg %p187
        %p443 = pneg %p184
        %p444 = pneg %p208
        %p445 = pneg %p205
        %p446 = pneg %p234
        %p447 = pneg %p231
        %s448 = sand.u32 %s221, 1
        %s449 = scalar_lea.sflag [#allocation5], %s448
        %s450 = sand.u32 %s221, 1
        %s451 = smul.addr %s450, 16
        %s452 = scalar_lea.vmem [#allocation15], %s451
        %v454 = vld [vmem:[%s7] ss:$4 sm:$0x3]
        %v455 = vld [vmem:[%s376] sm:$0xff]
        %v456 = vld [vmem:[%s376 + $0x8] sm:$0xff]
        %v457 = vpack.c.bf16 %v455, %v455
        %v458 = vpack.c.bf16 %v456, %v456
        %v459 = vld [vmem:[#allocation9] sm:$0xff]
        %v460 = vld [vmem:[#allocation9 + $0x8] sm:$0xff]
        %v461 = vld [vmem:[#allocation9 + $0x10] sm:$0xff]
        %v462 = vld [vmem:[#allocation9 + $0x18] sm:$0xff]
        %v463 = vld [vmem:[#allocation9 + $0x20] sm:$0xff]
        %v464 = vld [vmem:[#allocation9 + $0x28] sm:$0xff]
        %v465 = vld [vmem:[#allocation9 + $0x30] sm:$0xff]
        %v466 = vld [vmem:[#allocation9 + $0x38] sm:$0xff]
        %v467 = vld [vmem:[#allocation9 + $0x40] sm:$0xff]
        %v468 = vld [vmem:[#allocation9 + $0x48] sm:$0xff]
        %v469 = vld [vmem:[#allocation9 + $0x50] sm:$0xff]
        %v470 = vld [vmem:[#allocation9 + $0x58] sm:$0xff]
        %v471 = vld [vmem:[#allocation9 + $0x60] sm:$0xff]
        %v472 = vld [vmem:[#allocation9 + $0x68] sm:$0xff]
        %v473 = vld [vmem:[#allocation9 + $0x70] sm:$0xff]
        %v474 = vld [vmem:[#allocation9 + $0x78] sm:$0xff]
        %v475 = vld [vmem:[#allocation9 + $0x80] sm:$0xff]
        %v476 = vld [vmem:[#allocation9 + $0x88] sm:$0xff]
        %v477 = vld [vmem:[#allocation9 + $0x90] sm:$0xff]
        %v478 = vld [vmem:[#allocation9 + $0x98] sm:$0xff]
        %v479 = vld [vmem:[#allocation9 + $0xa0] sm:$0xff]
        %v480 = vld [vmem:[#allocation9 + $0xa8] sm:$0xff]
        %v481 = vld [vmem:[#allocation9 + $0xb0] sm:$0xff]
        %v482 = vld [vmem:[#allocation9 + $0xb8] sm:$0xff]
        %v483 = vld [vmem:[#allocation9 + $0xc0] sm:$0xff]
        %v484 = vld [vmem:[#allocation9 + $0xc8] sm:$0xff]
        %v485 = vld [vmem:[#allocation9 + $0xd0] sm:$0xff]
        %v486 = vld [vmem:[#allocation9 + $0xd8] sm:$0xff]
        %v487 = vld [vmem:[#allocation9 + $0xe0] sm:$0xff]
        %v488 = vld [vmem:[#allocation9 + $0xe8] sm:$0xff]
        %v489 = vld [vmem:[#allocation9 + $0xf0] sm:$0xff]
        %v490 = vld [vmem:[#allocation9 + $0xf8] sm:$0xff]
        %v492 = vlaneseq
        %v493 = vshrl.u32 %v492, 7
        %v494 = vsub.s32 0, %v493
        %v495 = vrot.slane %v454, %v494
        %v496 = vlaneseq
        %v497 = vshrl.u32 %v496, 7
        %v498 = vsub.s32 1, %v497
        %v499 = vrot.slane %v454, %v498
        %v534 = vunpack.c.l.b16 %v459
        %v535 = vunpack.c.h.b16 %v459
        %v536 = vunpack.c.l.b16 %v460
        %v537 = vunpack.c.h.b16 %v460
        %v538 = vunpack.c.l.b16 %v461
        %v539 = vunpack.c.h.b16 %v461
        %v540 = vunpack.c.l.b16 %v462
        %v541 = vunpack.c.h.b16 %v462
        %v542 = vunpack.c.l.b16 %v463
        %v543 = vunpack.c.h.b16 %v463
        %v544 = vunpack.c.l.b16 %v464
        %v545 = vunpack.c.h.b16 %v464
        %v546 = vunpack.c.l.b16 %v465
        %v547 = vunpack.c.h.b16 %v465
        %v548 = vunpack.c.l.b16 %v466
        %v549 = vunpack.c.h.b16 %v466
        %v550 = vunpack.c.l.b16 %v467
        %v551 = vunpack.c.h.b16 %v467
        %v552 = vunpack.c.l.b16 %v468
        %v553 = vunpack.c.h.b16 %v468
        %v554 = vunpack.c.l.b16 %v469
        %v555 = vunpack.c.h.b16 %v469
        %v556 = vunpack.c.l.b16 %v470
        %v557 = vunpack.c.h.b16 %v470
        %v558 = vunpack.c.l.b16 %v471
        %v559 = vunpack.c.h.b16 %v471
        %v560 = vunpack.c.l.b16 %v472
        %v561 = vunpack.c.h.b16 %v472
        %v562 = vunpack.c.l.b16 %v473
        %v563 = vunpack.c.h.b16 %v473
        %v564 = vunpack.c.l.b16 %v474
        %v565 = vunpack.c.h.b16 %v474
        %v566 = vunpack.c.l.b16 %v475
        %v567 = vunpack.c.h.b16 %v475
        %v568 = vunpack.c.l.b16 %v476
        %v569 = vunpack.c.h.b16 %v476
        %v570 = vunpack.c.l.b16 %v477
        %v571 = vunpack.c.h.b16 %v477
        %v572 = vunpack.c.l.b16 %v478
        %v573 = vunpack.c.h.b16 %v478
        %v574 = vunpack.c.l.b16 %v479
        %v575 = vunpack.c.h.b16 %v479
        %v576 = vunpack.c.l.b16 %v480
        %v577 = vunpack.c.h.b16 %v480
        %v578 = vunpack.c.l.b16 %v481
        %v579 = vunpack.c.h.b16 %v481
        %v580 = vunpack.c.l.b16 %v482
        %v581 = vunpack.c.h.b16 %v482
        %v582 = vunpack.c.l.b16 %v483
        %v583 = vunpack.c.h.b16 %v483
        %v584 = vunpack.c.l.b16 %v484
        %v585 = vunpack.c.h.b16 %v484
        %v586 = vunpack.c.l.b16 %v485
        %v587 = vunpack.c.h.b16 %v485
        %v588 = vunpack.c.l.b16 %v486
        %v589 = vunpack.c.h.b16 %v486
        %v590 = vunpack.c.l.b16 %v487
        %v591 = vunpack.c.h.b16 %v487
        %v592 = vunpack.c.l.b16 %v488
        %v593 = vunpack.c.h.b16 %v488
        %v594 = vunpack.c.l.b16 %v489
        %v595 = vunpack.c.h.b16 %v489
        %v596 = vunpack.c.l.b16 %v490
        %v597 = vunpack.c.h.b16 %v490
        %v598 = vpack.c.b16 %v536, %v534
        %v599 = vpack.c.b16 %v537, %v535
        %v600 = vpack.c.b16 %v540, %v538
        %v601 = vpack.c.b16 %v541, %v539
        %v602 = vpack.c.b16 %v544, %v542
        %v603 = vpack.c.b16 %v545, %v543
        %v604 = vpack.c.b16 %v548, %v546
        %v605 = vpack.c.b16 %v549, %v547
        %v606 = vpack.c.b16 %v552, %v550
        %v607 = vpack.c.b16 %v553, %v551
        %v608 = vpack.c.b16 %v556, %v554
        %v609 = vpack.c.b16 %v557, %v555
        %v610 = vpack.c.b16 %v560, %v558
        %v611 = vpack.c.b16 %v561, %v559
        %v612 = vpack.c.b16 %v564, %v562
        %v613 = vpack.c.b16 %v565, %v563
        %v614 = vpack.c.b16 %v568, %v566
        %v615 = vpack.c.b16 %v569, %v567
        %v616 = vpack.c.b16 %v572, %v570
        %v617 = vpack.c.b16 %v573, %v571
        %v618 = vpack.c.b16 %v576, %v574
        %v619 = vpack.c.b16 %v577, %v575
        %v620 = vpack.c.b16 %v580, %v578
        %v621 = vpack.c.b16 %v581, %v579
        %v622 = vpack.c.b16 %v584, %v582
        %v623 = vpack.c.b16 %v585, %v583
        %v624 = vpack.c.b16 %v588, %v586
        %v625 = vpack.c.b16 %v589, %v587
        %v626 = vpack.c.b16 %v592, %v590
        %v627 = vpack.c.b16 %v593, %v591
        %v628 = vpack.c.b16 %v596, %v594
        %v629 = vpack.c.b16 %v597, %v595
        %662 = vmatprep.subr.bf16.mxu0 %v599
        %663 = vmatpush1.bf16.msra.mxu0 %v598
        %664 = vmatprep.subr.bf16.mxu0 %v601
        %665 = vmatpush1.bf16.msra.mxu0 %v600
        %666 = vmatprep.subr.bf16.mxu0 %v603
        %667 = vmatpush1.bf16.msra.mxu0 %v602
        %668 = vmatprep.subr.bf16.mxu0 %v605
        %669 = vmatpush1.bf16.msra.mxu0 %v604
        %670 = vmatprep.subr.bf16.mxu0 %v607
        %671 = vmatpush1.bf16.msra.mxu0 %v606
        %672 = vmatprep.subr.bf16.mxu0 %v609
        %673 = vmatpush1.bf16.msra.mxu0 %v608
        %674 = vmatprep.subr.bf16.mxu0 %v611
        %675 = vmatpush1.bf16.msra.mxu0 %v610
        %676 = vmatprep.subr.bf16.mxu0 %v613
        %677 = vmatpush1.bf16.msra.mxu0 %v612
        %678 = vmatprep.subr.bf16.mxu0 %v615
        %679 = vmatpush1.bf16.msra.mxu0 %v614
        %680 = vmatprep.subr.bf16.mxu0 %v617
        %681 = vmatpush1.bf16.msra.mxu0 %v616
        %682 = vmatprep.subr.bf16.mxu0 %v619
        %683 = vmatpush1.bf16.msra.mxu0 %v618
        %684 = vmatprep.subr.bf16.mxu0 %v621
        %685 = vmatpush1.bf16.msra.mxu0 %v620
        %686 = vmatprep.subr.bf16.mxu0 %v623
        %687 = vmatpush1.bf16.msra.mxu0 %v622
        %688 = vmatprep.subr.bf16.mxu0 %v625
        %689 = vmatpush1.bf16.msra.mxu0 %v624
        %690 = vmatprep.subr.bf16.mxu0 %v627
        %691 = vmatpush1.bf16.msra.mxu0 %v626
        %692 = vmatprep.subr.bf16.mxu0 %v629
        %693 = vmatpush1.bf16.msra.mxu0 %v628
        %694 = vmatprep.mubr.bf16.mxu0 %v458
        %695 = vmatmul.mubr.bf16.gmra.mrb[0].mxu0 %v457
        %v696 = vpop.f32.mrb[0].mxu0
        %v697 = vadd.f32 %v495, %v696
        %v698 = vpop.f32.mrb[0].mxu0
        %v699 = vadd.f32 %v499, %v698
        %v700 = vpop.f32.mrb[0].mxu0
        %v701 = vpop.f32.mrb[0].mxu0
        %702 = vdwg.mxu0
        %v703 = vpack.c.bf16 %v697, %v697
        %v704 = vpack.c.bf16 %v699, %v699
        %s705 = scalar_lea.vmem %s7, 1
        %v706 = vld [vmem:[%s705] ss:$4 sm:$0x3]
        %v707 = vld [vmem:[%s385] sm:$0xff]
        %v708 = vld [vmem:[%s385 + $0x8] sm:$0xff]
        %v709 = vpack.c.bf16 %v707, %v707
        %v710 = vpack.c.bf16 %v708, %v708
        %v711 = vld [vmem:[#allocation11] sm:$0xff]
        %v712 = vld [vmem:[#allocation11 + $0x8] sm:$0xff]
        %v713 = vld [vmem:[#allocation11 + $0x10] sm:$0xff]
        %v714 = vld [vmem:[#allocation11 + $0x18] sm:$0xff]
        %v715 = vld [vmem:[#allocation11 + $0x20] sm:$0xff]
        %v716 = vld [vmem:[#allocation11 + $0x28] sm:$0xff]
        %v717 = vld [vmem:[#allocation11 + $0x30] sm:$0xff]
        %v718 = vld [vmem:[#allocation11 + $0x38] sm:$0xff]
        %v719 = vld [vmem:[#allocation11 + $0x40] sm:$0xff]
        %v720 = vld [vmem:[#allocation11 + $0x48] sm:$0xff]
        %v721 = vld [vmem:[#allocation11 + $0x50] sm:$0xff]
        %v722 = vld [vmem:[#allocation11 + $0x58] sm:$0xff]
        %v723 = vld [vmem:[#allocation11 + $0x60] sm:$0xff]
        %v724 = vld [vmem:[#allocation11 + $0x68] sm:$0xff]
        %v725 = vld [vmem:[#allocation11 + $0x70] sm:$0xff]
        %v726 = vld [vmem:[#allocation11 + $0x78] sm:$0xff]
        %v727 = vld [vmem:[#allocation11 + $0x80] sm:$0xff]
        %v728 = vld [vmem:[#allocation11 + $0x88] sm:$0xff]
        %v729 = vld [vmem:[#allocation11 + $0x90] sm:$0xff]
        %v730 = vld [vmem:[#allocation11 + $0x98] sm:$0xff]
        %v731 = vld [vmem:[#allocation11 + $0xa0] sm:$0xff]
        %v732 = vld [vmem:[#allocation11 + $0xa8] sm:$0xff]
        %v733 = vld [vmem:[#allocation11 + $0xb0] sm:$0xff]
        %v734 = vld [vmem:[#allocation11 + $0xb8] sm:$0xff]
        %v735 = vld [vmem:[#allocation11 + $0xc0] sm:$0xff]
        %v736 = vld [vmem:[#allocation11 + $0xc8] sm:$0xff]
        %v737 = vld [vmem:[#allocation11 + $0xd0] sm:$0xff]
        %v738 = vld [vmem:[#allocation11 + $0xd8] sm:$0xff]
        %v739 = vld [vmem:[#allocation11 + $0xe0] sm:$0xff]
        %v740 = vld [vmem:[#allocation11 + $0xe8] sm:$0xff]
        %v741 = vld [vmem:[#allocation11 + $0xf0] sm:$0xff]
        %v742 = vld [vmem:[#allocation11 + $0xf8] sm:$0xff]
        %v744 = vlaneseq
        %v745 = vshrl.u32 %v744, 7
        %v746 = vsub.s32 0, %v745
        %v747 = vrot.slane %v706, %v746
        %v748 = vlaneseq
        %v749 = vshrl.u32 %v748, 7
        %v750 = vsub.s32 1, %v749
        %v751 = vrot.slane %v706, %v750
        %v786 = vunpack.c.l.b16 %v711
        %v787 = vunpack.c.h.b16 %v711
        %v788 = vunpack.c.l.b16 %v712
        %v789 = vunpack.c.h.b16 %v712
        %v790 = vunpack.c.l.b16 %v713
        %v791 = vunpack.c.h.b16 %v713
        %v792 = vunpack.c.l.b16 %v714
        %v793 = vunpack.c.h.b16 %v714
        %v794 = vunpack.c.l.b16 %v715
        %v795 = vunpack.c.h.b16 %v715
        %v796 = vunpack.c.l.b16 %v716
        %v797 = vunpack.c.h.b16 %v716
        %v798 = vunpack.c.l.b16 %v717
        %v799 = vunpack.c.h.b16 %v717
        %v800 = vunpack.c.l.b16 %v718
        %v801 = vunpack.c.h.b16 %v718
        %v802 = vunpack.c.l.b16 %v719
        %v803 = vunpack.c.h.b16 %v719
        %v804 = vunpack.c.l.b16 %v720
        %v805 = vunpack.c.h.b16 %v720
        %v806 = vunpack.c.l.b16 %v721
        %v807 = vunpack.c.h.b16 %v721
        %v808 = vunpack.c.l.b16 %v722
        %v809 = vunpack.c.h.b16 %v722
        %v810 = vunpack.c.l.b16 %v723
        %v811 = vunpack.c.h.b16 %v723
        %v812 = vunpack.c.l.b16 %v724
        %v813 = vunpack.c.h.b16 %v724
        %v814 = vunpack.c.l.b16 %v725
        %v815 = vunpack.c.h.b16 %v725
        %v816 = vunpack.c.l.b16 %v726
        %v817 = vunpack.c.h.b16 %v726
        %v818 = vunpack.c.l.b16 %v727
        %v819 = vunpack.c.h.b16 %v727
        %v820 = vunpack.c.l.b16 %v728
        %v821 = vunpack.c.h.b16 %v728
        %v822 = vunpack.c.l.b16 %v729
        %v823 = vunpack.c.h.b16 %v729
        %v824 = vunpack.c.l.b16 %v730
        %v825 = vunpack.c.h.b16 %v730
        %v826 = vunpack.c.l.b16 %v731
        %v827 = vunpack.c.h.b16 %v731
        %v828 = vunpack.c.l.b16 %v732
        %v829 = vunpack.c.h.b16 %v732
        %v830 = vunpack.c.l.b16 %v733
        %v831 = vunpack.c.h.b16 %v733
        %v832 = vunpack.c.l.b16 %v734
        %v833 = vunpack.c.h.b16 %v734
        %v834 = vunpack.c.l.b16 %v735
        %v835 = vunpack.c.h.b16 %v735
        %v836 = vunpack.c.l.b16 %v736
        %v837 = vunpack.c.h.b16 %v736
        %v838 = vunpack.c.l.b16 %v737
        %v839 = vunpack.c.h.b16 %v737
        %v840 = vunpack.c.l.b16 %v738
        %v841 = vunpack.c.h.b16 %v738
        %v842 = vunpack.c.l.b16 %v739
        %v843 = vunpack.c.h.b16 %v739
        %v844 = vunpack.c.l.b16 %v740
        %v845 = vunpack.c.h.b16 %v740
        %v846 = vunpack.c.l.b16 %v741
        %v847 = vunpack.c.h.b16 %v741
        %v848 = vunpack.c.l.b16 %v742
        %v849 = vunpack.c.h.b16 %v742
        %v850 = vpack.c.b16 %v788, %v786
        %v851 = vpack.c.b16 %v789, %v787
        %v852 = vpack.c.b16 %v792, %v790
        %v853 = vpack.c.b16 %v793, %v791
        %v854 = vpack.c.b16 %v796, %v794
        %v855 = vpack.c.b16 %v797, %v795
        %v856 = vpack.c.b16 %v800, %v798
        %v857 = vpack.c.b16 %v801, %v799
        %v858 = vpack.c.b16 %v804, %v802
        %v859 = vpack.c.b16 %v805, %v803
        %v860 = vpack.c.b16 %v808, %v806
        %v861 = vpack.c.b16 %v809, %v807
        %v862 = vpack.c.b16 %v812, %v810
        %v863 = vpack.c.b16 %v813, %v811
        %v864 = vpack.c.b16 %v816, %v814
        %v865 = vpack.c.b16 %v817, %v815
        %v866 = vpack.c.b16 %v820, %v818
        %v867 = vpack.c.b16 %v821, %v819
        %v868 = vpack.c.b16 %v824, %v822
        %v869 = vpack.c.b16 %v825, %v823
        %v870 = vpack.c.b16 %v828, %v826
        %v871 = vpack.c.b16 %v829, %v827
        %v872 = vpack.c.b16 %v832, %v830
        %v873 = vpack.c.b16 %v833, %v831
        %v874 = vpack.c.b16 %v836, %v834
        %v875 = vpack.c.b16 %v837, %v835
        %v876 = vpack.c.b16 %v840, %v838
        %v877 = vpack.c.b16 %v841, %v839
        %v878 = vpack.c.b16 %v844, %v842
        %v879 = vpack.c.b16 %v845, %v843
        %v880 = vpack.c.b16 %v848, %v846
        %v881 = vpack.c.b16 %v849, %v847
        %914 = vmatprep.subr.bf16.mxu0 %v851
        %915 = vmatpush1.bf16.msra.mxu0 %v850
        %916 = vmatprep.subr.bf16.mxu0 %v853
        %917 = vmatpush1.bf16.msra.mxu0 %v852
        %918 = vmatprep.subr.bf16.mxu0 %v855
        %919 = vmatpush1.bf16.msra.mxu0 %v854
        %920 = vmatprep.subr.bf16.mxu0 %v857
        %921 = vmatpush1.bf16.msra.mxu0 %v856
        %922 = vmatprep.subr.bf16.mxu0 %v859
        %923 = vmatpush1.bf16.msra.mxu0 %v858
        %924 = vmatprep.subr.bf16.mxu0 %v861
        %925 = vmatpush1.bf16.msra.mxu0 %v860
        %926 = vmatprep.subr.bf16.mxu0 %v863
        %927 = vmatpush1.bf16.msra.mxu0 %v862
        %928 = vmatprep.subr.bf16.mxu0 %v865
        %929 = vmatpush1.bf16.msra.mxu0 %v864
        %930 = vmatprep.subr.bf16.mxu0 %v867
        %931 = vmatpush1.bf16.msra.mxu0 %v866
        %932 = vmatprep.subr.bf16.mxu0 %v869
        %933 = vmatpush1.bf16.msra.mxu0 %v868
        %934 = vmatprep.subr.bf16.mxu0 %v871
        %935 = vmatpush1.bf16.msra.mxu0 %v870
        %936 = vmatprep.subr.bf16.mxu0 %v873
        %937 = vmatpush1.bf16.msra.mxu0 %v872
        %938 = vmatprep.subr.bf16.mxu0 %v875
        %939 = vmatpush1.bf16.msra.mxu0 %v874
        %940 = vmatprep.subr.bf16.mxu0 %v877
        %941 = vmatpush1.bf16.msra.mxu0 %v876
        %942 = vmatprep.subr.bf16.mxu0 %v879
        %943 = vmatpush1.bf16.msra.mxu0 %v878
        %944 = vmatprep.subr.bf16.mxu0 %v881
        %945 = vmatpush1.bf16.msra.mxu0 %v880
        %946 = vmatprep.mubr.bf16.mxu0 %v710
        %947 = vmatmul.mubr.bf16.gmra.mrb[0].mxu0 %v709
        %v948 = vpop.f32.mrb[0].mxu0
        %v949 = vadd.f32 %v747, %v948
        %v950 = vpop.f32.mrb[0].mxu0
        %v951 = vadd.f32 %v751, %v950
        %v952 = vpop.f32.mrb[0].mxu0
        %v953 = vpop.f32.mrb[0].mxu0
        %954 = vdwg.mxu0
        %v955 = vpack.c.bf16 %v949, %v949
        %v956 = vpack.c.bf16 %v951, %v951
        %s957 = scalar_lea.vmem %s7, 2
        %v958 = vld [vmem:[%s957] ss:$4 sm:$0x3]
        %v959 = vld [vmem:[%s394] sm:$0xff]
        %v960 = vld [vmem:[%s394 + $0x8] sm:$0xff]
        %v961 = vpack.c.bf16 %v959, %v959
        %v962 = vpack.c.bf16 %v960, %v960
        %v963 = vld [vmem:[#allocation12] sm:$0xff]
        %v964 = vld [vmem:[#allocation12 + $0x8] sm:$0xff]
        %v965 = vld [vmem:[#allocation12 + $0x10] sm:$0xff]
        %v966 = vld [vmem:[#allocation12 + $0x18] sm:$0xff]
        %v967 = vld [vmem:[#allocation12 + $0x20] sm:$0xff]
        %v968 = vld [vmem:[#allocation12 + $0x28] sm:$0xff]
        %v969 = vld [vmem:[#allocation12 + $0x30] sm:$0xff]
        %v970 = vld [vmem:[#allocation12 + $0x38] sm:$0xff]
        %v971 = vld [vmem:[#allocation12 + $0x40] sm:$0xff]
        %v972 = vld [vmem:[#allocation12 + $0x48] sm:$0xff]
        %v973 = vld [vmem:[#allocation12 + $0x50] sm:$0xff]
        %v974 = vld [vmem:[#allocation12 + $0x58] sm:$0xff]
        %v975 = vld [vmem:[#allocation12 + $0x60] sm:$0xff]
        %v976 = vld [vmem:[#allocation12 + $0x68] sm:$0xff]
        %v977 = vld [vmem:[#allocation12 + $0x70] sm:$0xff]
        %v978 = vld [vmem:[#allocation12 + $0x78] sm:$0xff]
        %v979 = vld [vmem:[#allocation12 + $0x80] sm:$0xff]
        %v980 = vld [vmem:[#allocation12 + $0x88] sm:$0xff]
        %v981 = vld [vmem:[#allocation12 + $0x90] sm:$0xff]
        %v982 = vld [vmem:[#allocation12 + $0x98] sm:$0xff]
        %v983 = vld [vmem:[#allocation12 + $0xa0] sm:$0xff]
        %v984 = vld [vmem:[#allocation12 + $0xa8] sm:$0xff]
        %v985 = vld [vmem:[#allocation12 + $0xb0] sm:$0xff]
        %v986 = vld [vmem:[#allocation12 + $0xb8] sm:$0xff]
        %v987 = vld [vmem:[#allocation12 + $0xc0] sm:$0xff]
        %v988 = vld [vmem:[#allocation12 + $0xc8] sm:$0xff]
        %v989 = vld [vmem:[#allocation12 + $0xd0] sm:$0xff]
        %v990 = vld [vmem:[#allocation12 + $0xd8] sm:$0xff]
        %v991 = vld [vmem:[#allocation12 + $0xe0] sm:$0xff]
        %v992 = vld [vmem:[#allocation12 + $0xe8] sm:$0xff]
        %v993 = vld [vmem:[#allocation12 + $0xf0] sm:$0xff]
        %v994 = vld [vmem:[#allocation12 + $0xf8] sm:$0xff]
        %v996 = vlaneseq
        %v997 = vshrl.u32 %v996, 7
        %v998 = vsub.s32 0, %v997
        %v999 = vrot.slane %v958, %v998
        %v1000 = vlaneseq
        %v1001 = vshrl.u32 %v1000, 7
        %v1002 = vsub.s32 1, %v1001
        %v1003 = vrot.slane %v958, %v1002
        %v1038 = vunpack.c.l.b16 %v963
        %v1039 = vunpack.c.h.b16 %v963
        %v1040 = vunpack.c.l.b16 %v964
        %v1041 = vunpack.c.h.b16 %v964
        %v1042 = vunpack.c.l.b16 %v965
        %v1043 = vunpack.c.h.b16 %v965
        %v1044 = vunpack.c.l.b16 %v966
        %v1045 = vunpack.c.h.b16 %v966
        %v1046 = vunpack.c.l.b16 %v967
        %v1047 = vunpack.c.h.b16 %v967
        %v1048 = vunpack.c.l.b16 %v968
        %v1049 = vunpack.c.h.b16 %v968
        %v1050 = vunpack.c.l.b16 %v969
        %v1051 = vunpack.c.h.b16 %v969
        %v1052 = vunpack.c.l.b16 %v970
        %v1053 = vunpack.c.h.b16 %v970
        %v1054 = vunpack.c.l.b16 %v971
        %v1055 = vunpack.c.h.b16 %v971
        %v1056 = vunpack.c.l.b16 %v972
        %v1057 = vunpack.c.h.b16 %v972
        %v1058 = vunpack.c.l.b16 %v973
        %v1059 = vunpack.c.h.b16 %v973
        %v1060 = vunpack.c.l.b16 %v974
        %v1061 = vunpack.c.h.b16 %v974
        %v1062 = vunpack.c.l.b16 %v975
        %v1063 = vunpack.c.h.b16 %v975
        %v1064 = vunpack.c.l.b16 %v976
        %v1065 = vunpack.c.h.b16 %v976
        %v1066 = vunpack.c.l.b16 %v977
        %v1067 = vunpack.c.h.b16 %v977
        %v1068 = vunpack.c.l.b16 %v978
        %v1069 = vunpack.c.h.b16 %v978
        %v1070 = vunpack.c.l.b16 %v979
        %v1071 = vunpack.c.h.b16 %v979
        %v1072 = vunpack.c.l.b16 %v980
        %v1073 = vunpack.c.h.b16 %v980
        %v1074 = vunpack.c.l.b16 %v981
        %v1075 = vunpack.c.h.b16 %v981
        %v1076 = vunpack.c.l.b16 %v982
        %v1077 = vunpack.c.h.b16 %v982
        %v1078 = vunpack.c.l.b16 %v983
        %v1079 = vunpack.c.h.b16 %v983
        %v1080 = vunpack.c.l.b16 %v984
        %v1081 = vunpack.c.h.b16 %v984
        %v1082 = vunpack.c.l.b16 %v985
        %v1083 = vunpack.c.h.b16 %v985
        %v1084 = vunpack.c.l.b16 %v986
        %v1085 = vunpack.c.h.b16 %v986
        %v1086 = vunpack.c.l.b16 %v987
        %v1087 = vunpack.c.h.b16 %v987
        %v1088 = vunpack.c.l.b16 %v988
        %v1089 = vunpack.c.h.b16 %v988
        %v1090 = vunpack.c.l.b16 %v989
        %v1091 = vunpack.c.h.b16 %v989
        %v1092 = vunpack.c.l.b16 %v990
        %v1093 = vunpack.c.h.b16 %v990
        %v1094 = vunpack.c.l.b16 %v991
        %v1095 = vunpack.c.h.b16 %v991
        %v1096 = vunpack.c.l.b16 %v992
        %v1097 = vunpack.c.h.b16 %v992
        %v1098 = vunpack.c.l.b16 %v993
        %v1099 = vunpack.c.h.b16 %v993
        %v1100 = vunpack.c.l.b16 %v994
        %v1101 = vunpack.c.h.b16 %v994
        %v1102 = vpack.c.b16 %v1040, %v1038
        %v1103 = vpack.c.b16 %v1041, %v1039
        %v1104 = vpack.c.b16 %v1044, %v1042
        %v1105 = vpack.c.b16 %v1045, %v1043
        %v1106 = vpack.c.b16 %v1048, %v1046
        %v1107 = vpack.c.b16 %v1049, %v1047
        %v1108 = vpack.c.b16 %v1052, %v1050
        %v1109 = vpack.c.b16 %v1053, %v1051
        %v1110 = vpack.c.b16 %v1056, %v1054
        %v1111 = vpack.c.b16 %v1057, %v1055
        %v1112 = vpack.c.b16 %v1060, %v1058
        %v1113 = vpack.c.b16 %v1061, %v1059
        %v1114 = vpack.c.b16 %v1064, %v1062
        %v1115 = vpack.c.b16 %v1065, %v1063
        %v1116 = vpack.c.b16 %v1068, %v1066
        %v1117 = vpack.c.b16 %v1069, %v1067
        %v1118 = vpack.c.b16 %v1072, %v1070
        %v1119 = vpack.c.b16 %v1073, %v1071
        %v1120 = vpack.c.b16 %v1076, %v1074
        %v1121 = vpack.c.b16 %v1077, %v1075
        %v1122 = vpack.c.b16 %v1080, %v1078
        %v1123 = vpack.c.b16 %v1081, %v1079
        %v1124 = vpack.c.b16 %v1084, %v1082
        %v1125 = vpack.c.b16 %v1085, %v1083
        %v1126 = vpack.c.b16 %v1088, %v1086
        %v1127 = vpack.c.b16 %v1089, %v1087
        %v1128 = vpack.c.b16 %v1092, %v1090
        %v1129 = vpack.c.b16 %v1093, %v1091
        %v1130 = vpack.c.b16 %v1096, %v1094
        %v1131 = vpack.c.b16 %v1097, %v1095
        %v1132 = vpack.c.b16 %v1100, %v1098
        %v1133 = vpack.c.b16 %v1101, %v1099
        %1166 = vmatprep.subr.bf16.mxu0 %v1103
        %1167 = vmatpush1.bf16.msra.mxu0 %v1102
        %1168 = vmatprep.subr.bf16.mxu0 %v1105
        %1169 = vmatpush1.bf16.msra.mxu0 %v1104
        %1170 = vmatprep.subr.bf16.mxu0 %v1107
        %1171 = vmatpush1.bf16.msra.mxu0 %v1106
        %1172 = vmatprep.subr.bf16.mxu0 %v1109
        %1173 = vmatpush1.bf16.msra.mxu0 %v1108
        %1174 = vmatprep.subr.bf16.mxu0 %v1111
        %1175 = vmatpush1.bf16.msra.mxu0 %v1110
        %1176 = vmatprep.subr.bf16.mxu0 %v1113
        %1177 = vmatpush1.bf16.msra.mxu0 %v1112
        %1178 = vmatprep.subr.bf16.mxu0 %v1115
        %1179 = vmatpush1.bf16.msra.mxu0 %v1114
        %1180 = vmatprep.subr.bf16.mxu0 %v1117
        %1181 = vmatpush1.bf16.msra.mxu0 %v1116
        %1182 = vmatprep.subr.bf16.mxu0 %v1119
        %1183 = vmatpush1.bf16.msra.mxu0 %v1118
        %1184 = vmatprep.subr.bf16.mxu0 %v1121
        %1185 = vmatpush1.bf16.msra.mxu0 %v1120
        %1186 = vmatprep.subr.bf16.mxu0 %v1123
        %1187 = vmatpush1.bf16.msra.mxu0 %v1122
        %1188 = vmatprep.subr.bf16.mxu0 %v1125
        %1189 = vmatpush1.bf16.msra.mxu0 %v1124
        %1190 = vmatprep.subr.bf16.mxu0 %v1127
        %1191 = vmatpush1.bf16.msra.mxu0 %v1126
        %1192 = vmatprep.subr.bf16.mxu0 %v1129
        %1193 = vmatpush1.bf16.msra.mxu0 %v1128
        %1194 = vmatprep.subr.bf16.mxu0 %v1131
        %1195 = vmatpush1.bf16.msra.mxu0 %v1130
        %1196 = vmatprep.subr.bf16.mxu0 %v1133
        %1197 = vmatpush1.bf16.msra.mxu0 %v1132
        %1198 = vmatprep.mubr.bf16.mxu0 %v962
        %1199 = vmatmul.mubr.bf16.gmra.mrb[0].mxu0 %v961
        %v1200 = vpop.f32.mrb[0].mxu0
        %v1201 = vadd.f32 %v999, %v1200
        %v1202 = vpop.f32.mrb[0].mxu0
        %v1203 = vadd.f32 %v1003, %v1202
        %v1204 = vpop.f32.mrb[0].mxu0
        %v1205 = vpop.f32.mrb[0].mxu0
        %1206 = vdwg.mxu0
        %v1207 = vpack.c.bf16 %v1201, %v1201
        %v1208 = vpack.c.bf16 %v1203, %v1203
        %s1209 = scalar_lea.vmem %s7, 3
        %v1210 = vld [vmem:[%s1209] ss:$4 sm:$0x3]
        %vm1211 = vcmask 261120
        %v1213 = vsel %vm1211, %v703, 0
        %v1216 = vsel %vm1211, %v955, 0
        %1218 = vmatprep.subr.bf16.mxu0 0
        %1219 = vmatpush1.bf16.xpose.msra.mxu0 %v1216
        %1220 = vmatprep.subr.bf16.mxu0 0
        %1221 = vmatpush1.bf16.xpose.msra.mxu0 0
        %1222 = vmatprep.subr.bf16.mxu0 0
        %1223 = vmatpush1.bf16.xpose.msra.mxu0 0
        %1224 = vmatprep.subr.bf16.mxu0 0
        %1225 = vmatpush1.bf16.xpose.msra.mxu0 0
        %1226 = vmatprep.subr.bf16.mxu0 0
        %1227 = vmatpush1.bf16.xpose.msra.mxu0 0
        %1228 = vmatprep.subr.bf16.mxu0 0
        %1229 = vmatpush1.bf16.xpose.msra.mxu0 0
        %1230 = vmatprep.subr.bf16.mxu0 0
        %1231 = vmatpush1.bf16.xpose.msra.mxu0 0
        %1232 = vmatprep.subr.bf16.mxu0 0
        %1233 = vmatpush1.bf16.xpose.msra.mxu0 0
        %1234 = vmatprep.subr.bf16.mxu0 0
        %1235 = vmatpush1.bf16.xpose.msra.mxu0 0
        %1236 = vmatprep.subr.bf16.mxu0 0
        %1237 = vmatpush1.bf16.xpose.msra.mxu0 0
        %1238 = vmatprep.subr.bf16.mxu0 0
        %1239 = vmatpush1.bf16.xpose.msra.mxu0 0
        %1240 = vmatprep.subr.bf16.mxu0 0
        %1241 = vmatpush1.bf16.xpose.msra.mxu0 0
        %1242 = vmatprep.subr.bf16.mxu0 0
        %1243 = vmatpush1.bf16.xpose.msra.mxu0 0
        %1244 = vmatprep.subr.bf16.mxu0 0
        %1245 = vmatpush1.bf16.xpose.msra.mxu0 0
        %1246 = vmatprep.subr.bf16.mxu0 0
        %1247 = vmatpush1.bf16.xpose.msra.mxu0 0
        %1248 = vmatprep.subr.bf16.mxu0 0
        %1249 = vmatpush1.bf16.xpose.msra.mxu0 0
        %1250 = vmatprep.mubr.bf16.mxu0 0
        %1251 = vmatmul.mubr.bf16.gmra.mrb[0].mxu0 %v1213
        %v1252 = vpop.f32.mrb[0].mxu0
        %v1253 = vadd.f32 0.0, %v1252
        %v1254 = vpop.f32.mrb[0].mxu0
        %v1255 = vpop.f32.mrb[0].mxu0
        %v1256 = vpop.f32.mrb[0].mxu0
        %1257 = vdwg.mxu0
        %vm1258 = vcmask 64512
        %v1259 = vsel %vm1258, %v1253, -inf
        %1260 = vmax.xlane.f32.xlu0 %v1259
        %v1261 = vpop.xlane.xlu0 %1260
        %v1262 = vsub.f32 %v1253, %v1261
        %v1263 = vmul.f32 %v1262, 1.442695
        %v1264 = vpow.pop %v1263
        %v1265 = vsel %vm1258, %v1264, 0.0
        %1266 = vadd.xlane.f32.xlu0 %v1265
        %v1267 = vpop.xlane.xlu0 %1266
        %v1268 = vpack.c.bf16 %v1264, %v1264
        %v1270 = vsel %vm1258, %v1268, 0
        %vm1272 = vcmask 1043456
        %v1274 = vsel %vm1272, %v1207, 0
        %1276 = vmatprep.subr.bf16.mxu0 0
        %1277 = vmatpush1.bf16.msra.mxu0 %v1274
        %1278 = vmatprep.subr.bf16.mxu0 0
        %1279 = vmatpush1.bf16.msra.mxu0 0
        %1280 = vmatprep.subr.bf16.mxu0 0
        %1281 = vmatpush1.bf16.msra.mxu0 0
        %1282 = vmatprep.subr.bf16.mxu0 0
        %1283 = vmatpush1.bf16.msra.mxu0 0
        %1284 = vmatprep.subr.bf16.mxu0 0
        %1285 = vmatpush1.bf16.msra.mxu0 0
        %1286 = vmatprep.subr.bf16.mxu0 0
        %1287 = vmatpush1.bf16.msra.mxu0 0
        %1288 = vmatprep.subr.bf16.mxu0 0
        %1289 = vmatpush1.bf16.msra.mxu0 0
        %1290 = vmatprep.subr.bf16.mxu0 0
        %1291 = vmatpush1.bf16.msra.mxu0 0
        %1292 = vmatprep.subr.bf16.mxu0 0
        %1293 = vmatpush1.bf16.msra.mxu0 0
        %1294 = vmatprep.subr.bf16.mxu0 0
        %1295 = vmatpush1.bf16.msra.mxu0 0
        %1296 = vmatprep.subr.bf16.mxu0 0
        %1297 = vmatpush1.bf16.msra.mxu0 0
        %1298 = vmatprep.subr.bf16.mxu0 0
        %1299 = vmatpush1.bf16.msra.mxu0 0
        %1300 = vmatprep.subr.bf16.mxu0 0
        %1301 = vmatpush1.bf16.msra.mxu0 0
        %1302 = vmatprep.subr.bf16.mxu0 0
        %1303 = vmatpush1.bf16.msra.mxu0 0
        %1304 = vmatprep.subr.bf16.mxu0 0
        %1305 = vmatpush1.bf16.msra.mxu0 0
        %1306 = vmatprep.subr.bf16.mxu0 0
        %1307 = vmatpush1.bf16.msra.mxu0 0
        %1308 = vmatprep.mubr.bf16.mxu0 0
        %1309 = vmatmul.mubr.bf16.gmra.mrb[0].mxu0 %v1270
        %v1310 = vpop.f32.mrb[0].mxu0
        %v1311 = vadd.f32 0.0, %v1310
        %v1312 = vpop.f32.mrb[0].mxu0
        %v1313 = vpop.f32.mrb[0].mxu0
        %v1314 = vpop.f32.mrb[0].mxu0
        %1315 = vdwg.mxu0
        %v1316 = vrcp.pop %v1267
        %v1317 = vmul.f32 %v1311, %v1316
        %v1318 = vpack.c.bf16 %v1317, %v1317
        %vm1319 = vcmask 257024
        %1320 = vst.msk [vmem:[#allocation2] sm:$0xf] %vm1319, %v1318
        %1322 = vrot.lane.b32.xlu0 %v703, 96
        %v1323 = vpop.permute.xlu0 %1322
        %1325 = vrot.lane.b32.xlu0 %v955, 96
        %v1326 = vpop.permute.xlu0 %1325
        %v1328 = vsel %vm1211, %v1323, 0
        %v1331 = vsel %vm1211, %v1326, 0
        %1333 = vmatprep.subr.bf16.mxu0 0
        %1334 = vmatpush1.bf16.xpose.msra.mxu0 %v1331
        %1335 = vmatprep.subr.bf16.mxu0 0
        %1336 = vmatpush1.bf16.xpose.msra.mxu0 0
        %1337 = vmatprep.subr.bf16.mxu0 0
        %1338 = vmatpush1.bf16.xpose.msra.mxu0 0
        %1339 = vmatprep.subr.bf16.mxu0 0
        %1340 = vmatpush1.bf16.xpose.msra.mxu0 0
        %1341 = vmatprep.subr.bf16.mxu0 0
        %1342 = vmatpush1.bf16.xpose.msra.mxu0 0
        %1343 = vmatprep.subr.bf16.mxu0 0
        %1344 = vmatpush1.bf16.xpose.msra.mxu0 0
        %1345 = vmatprep.subr.bf16.mxu0 0
        %1346 = vmatpush1.bf16.xpose.msra.mxu0 0
        %1347 = vmatprep.subr.bf16.mxu0 0
        %1348 = vmatpush1.bf16.xpose.msra.mxu0 0
        %1349 = vmatprep.subr.bf16.mxu0 0
        %1350 = vmatpush1.bf16.xpose.msra.mxu0 0
        %1351 = vmatprep.subr.bf16.mxu0 0
        %1352 = vmatpush1.bf16.xpose.msra.mxu0 0
        %1353 = vmatprep.subr.bf16.mxu0 0
        %1354 = vmatpush1.bf16.xpose.msra.mxu0 0
        %1355 = vmatprep.subr.bf16.mxu0 0
        %1356 = vmatpush1.bf16.xpose.msra.mxu0 0
        %1357 = vmatprep.subr.bf16.mxu0 0
        %1358 = vmatpush1.bf16.xpose.msra.mxu0 0
        %1359 = vmatprep.subr.bf16.mxu0 0
        %1360 = vmatpush1.bf16.xpose.msra.mxu0 0
        %1361 = vmatprep.subr.bf16.mxu0 0
        %1362 = vmatpush1.bf16.xpose.msra.mxu0 0
        %1363 = vmatprep.subr.bf16.mxu0 0
        %1364 = vmatpush1.bf16.xpose.msra.mxu0 0
        %1365 = vmatprep.mubr.bf16.mxu0 0
        %1366 = vmatmul.mubr.bf16.gmra.mrb[0].mxu0 %v1328
        %v1367 = vpop.f32.mrb[0].mxu0
        %v1368 = vadd.f32 0.0, %v1367
        %v1369 = vpop.f32.mrb[0].mxu0
        %v1370 = vpop.f32.mrb[0].mxu0
        %v1371 = vpop.f32.mrb[0].mxu0
        %1372 = vdwg.mxu0
        %v1373 = vsel %vm1258, %v1368, -inf
        %1374 = vmax.xlane.f32.xlu0 %v1373
        %v1375 = vpop.xlane.xlu0 %1374
        %v1376 = vsub.f32 %v1368, %v1375
        %v1377 = vmul.f32 %v1376, 1.442695
        %v1378 = vpow.pop %v1377
        %v1379 = vsel %vm1258, %v1378, 0.0
        %1380 = vadd.xlane.f32.xlu0 %v1379
        %v1381 = vpop.xlane.xlu0 %1380
        %v1382 = vpack.c.bf16 %v1378, %v1378
        %1384 = vrot.lane.b32.xlu0 %v1207, 96
        %v1385 = vpop.permute.xlu0 %1384
        %v1387 = vsel %vm1258, %v1382, 0
        %v1390 = vsel %vm1272, %v1385, 0
        %1392 = vmatprep.subr.bf16.mxu0 0
        %1393 = vmatpush1.bf16.msra.mxu0 %v1390
        %1394 = vmatprep.subr.bf16.mxu0 0
        %1395 = vmatpush1.bf16.msra.mxu0 0
        %1396 = vmatprep.subr.bf16.mxu0 0
        %1397 = vmatpush1.bf16.msra.mxu0 0
        %1398 = vmatprep.subr.bf16.mxu0 0
        %1399 = vmatpush1.bf16.msra.mxu0 0
        %1400 = vmatprep.subr.bf16.mxu0 0
        %1401 = vmatpush1.bf16.msra.mxu0 0
        %1402 = vmatprep.subr.bf16.mxu0 0
        %1403 = vmatpush1.bf16.msra.mxu0 0
        %1404 = vmatprep.subr.bf16.mxu0 0
        %1405 = vmatpush1.bf16.msra.mxu0 0
        %1406 = vmatprep.subr.bf16.mxu0 0
        %1407 = vmatpush1.bf16.msra.mxu0 0
        %1408 = vmatprep.subr.bf16.mxu0 0
        %1409 = vmatpush1.bf16.msra.mxu0 0
        %1410 = vmatprep.subr.bf16.mxu0 0
        %1411 = vmatpush1.bf16.msra.mxu0 0
        %1412 = vmatprep.subr.bf16.mxu0 0
        %1413 = vmatpush1.bf16.msra.mxu0 0
        %1414 = vmatprep.subr.bf16.mxu0 0
        %1415 = vmatpush1.bf16.msra.mxu0 0
        %1416 = vmatprep.subr.bf16.mxu0 0
        %1417 = vmatpush1.bf16.msra.mxu0 0
        %1418 = vmatprep.subr.bf16.mxu0 0
        %1419 = vmatpush1.bf16.msra.mxu0 0
        %1420 = vmatprep.subr.bf16.mxu0 0
        %1421 = vmatpush1.bf16.msra.mxu0 0
        %1422 = vmatprep.subr.bf16.mxu0 0
        %1423 = vmatpush1.bf16.msra.mxu0 0
        %1424 = vmatprep.mubr.bf16.mxu0 0
        %1425 = vmatmul.mubr.bf16.gmra.mrb[0].mxu0 %v1387
        %v1426 = vpop.f32.mrb[0].mxu0
        %v1427 = vadd.f32 0.0, %v1426
        %v1428 = vpop.f32.mrb[0].mxu0
        %v1429 = vpop.f32.mrb[0].mxu0
        %v1430 = vpop.f32.mrb[0].mxu0
        %1431 = vdwg.mxu0
        %v1432 = vrcp.pop %v1381
        %v1433 = vmul.f32 %v1427, %v1432
        %v1434 = vpack.c.bf16 %v1433, %v1433
        %v1436 = vunpack.c.l.b16 %v1434
        %v1437 = vpack.c.b16 %v1436, %v1436
        %1438 = vrot.lane.b32.xlu0 %v1437, 32
        %v1439 = vpop.permute.xlu0 %1438
        %vm1441 = vcmask 519424
        %1442 = vst.msk [vmem:[#allocation2] sm:$0xf] %vm1441, %v1439
        %1443 = vrot.lane.b32.xlu0 %v703, 64
        %v1444 = vpop.permute.xlu0 %1443
        %1445 = vrot.lane.b32.xlu0 %v955, 64
        %v1446 = vpop.permute.xlu0 %1445
        %v1448 = vsel %vm1211, %v1444, 0
        %v1451 = vsel %vm1211, %v1446, 0
        %1453 = vmatprep.subr.bf16.mxu0 0
        %1454 = vmatpush1.bf16.xpose.msra.mxu0 %v1451
        %1455 = vmatprep.subr.bf16.mxu0 0
        %1456 = vmatpush1.bf16.xpose.msra.mxu0 0
        %1457 = vmatprep.subr.bf16.mxu0 0
        %1458 = vmatpush1.bf16.xpose.msra.mxu0 0
        %1459 = vmatprep.subr.bf16.mxu0 0
        %1460 = vmatpush1.bf16.xpose.msra.mxu0 0
        %1461 = vmatprep.subr.bf16.mxu0 0
        %1462 = vmatpush1.bf16.xpose.msra.mxu0 0
        %1463 = vmatprep.subr.bf16.mxu0 0
        %1464 = vmatpush1.bf16.xpose.msra.mxu0 0
        %1465 = vmatprep.subr.bf16.mxu0 0
        %1466 = vmatpush1.bf16.xpose.msra.mxu0 0
        %1467 = vmatprep.subr.bf16.mxu0 0
        %1468 = vmatpush1.bf16.xpose.msra.mxu0 0
        %1469 = vmatprep.subr.bf16.mxu0 0
        %1470 = vmatpush1.bf16.xpose.msra.mxu0 0
        %1471 = vmatprep.subr.bf16.mxu0 0
        %1472 = vmatpush1.bf16.xpose.msra.mxu0 0
        %1473 = vmatprep.subr.bf16.mxu0 0
        %1474 = vmatpush1.bf16.xpose.msra.mxu0 0
        %1475 = vmatprep.subr.bf16.mxu0 0
        %1476 = vmatpush1.bf16.xpose.msra.mxu0 0
        %1477 = vmatprep.subr.bf16.mxu0 0
        %1478 = vmatpush1.bf16.xpose.msra.mxu0 0
        %1479 = vmatprep.subr.bf16.mxu0 0
        %1480 = vmatpush1.bf16.xpose.msra.mxu0 0
        %1481 = vmatprep.subr.bf16.mxu0 0
        %1482 = vmatpush1.bf16.xpose.msra.mxu0 0
        %1483 = vmatprep.subr.bf16.mxu0 0
        %1484 = vmatpush1.bf16.xpose.msra.mxu0 0
        %1485 = vmatprep.mubr.bf16.mxu0 0
        %1486 = vmatmul.mubr.bf16.gmra.mrb[0].mxu0 %v1448
        %v1487 = vpop.f32.mrb[0].mxu0
        %v1488 = vadd.f32 0.0, %v1487
        %v1489 = vpop.f32.mrb[0].mxu0
        %v1490 = vpop.f32.mrb[0].mxu0
        %v1491 = vpop.f32.mrb[0].mxu0
        %1492 = vdwg.mxu0
        %v1493 = vsel %vm1258, %v1488, -inf
        %1494 = vmax.xlane.f32.xlu0 %v1493
        %v1495 = vpop.xlane.xlu0 %1494
        %v1496 = vsub.f32 %v1488, %v1495
        %v1497 = vmul.f32 %v1496, 1.442695
        %v1498 = vpow.pop %v1497
        %v1499 = vsel %vm1258, %v1498, 0.0
        %1500 = vadd.xlane.f32.xlu0 %v1499
        %v1501 = vpop.xlane.xlu0 %1500
        %v1502 = vpack.c.bf16 %v1498, %v1498
        %1503 = vrot.lane.b32.xlu0 %v1207, 64
        %v1504 = vpop.permute.xlu0 %1503
        %v1506 = vsel %vm1258, %v1502, 0
        %v1509 = vsel %vm1272, %v1504, 0
        %1511 = vmatprep.subr.bf16.mxu0 0
        %1512 = vmatpush1.bf16.msra.mxu0 %v1509
        %1513 = vmatprep.subr.bf16.mxu0 0
        %1514 = vmatpush1.bf16.msra.mxu0 0
        %1515 = vmatprep.subr.bf16.mxu0 0
        %1516 = vmatpush1.bf16.msra.mxu0 0
        %1517 = vmatprep.subr.bf16.mxu0 0
        %1518 = vmatpush1.bf16.msra.mxu0 0
        %1519 = vmatprep.subr.bf16.mxu0 0
        %1520 = vmatpush1.bf16.msra.mxu0 0
        %1521 = vmatprep.subr.bf16.mxu0 0
        %1522 = vmatpush1.bf16.msra.mxu0 0
        %1523 = vmatprep.subr.bf16.mxu0 0
        %1524 = vmatpush1.bf16.msra.mxu0 0
        %1525 = vmatprep.subr.bf16.mxu0 0
        %1526 = vmatpush1.bf16.msra.mxu0 0
        %1527 = vmatprep.subr.bf16.mxu0 0
        %1528 = vmatpush1.bf16.msra.mxu0 0
        %1529 = vmatprep.subr.bf16.mxu0 0
        %1530 = vmatpush1.bf16.msra.mxu0 0
        %1531 = vmatprep.subr.bf16.mxu0 0
        %1532 = vmatpush1.bf16.msra.mxu0 0
        %1533 = vmatprep.subr.bf16.mxu0 0
        %1534 = vmatpush1.bf16.msra.mxu0 0
        %1535 = vmatprep.subr.bf16.mxu0 0
        %1536 = vmatpush1.bf16.msra.mxu0 0
        %1537 = vmatprep.subr.bf16.mxu0 0
        %1538 = vmatpush1.bf16.msra.mxu0 0
        %1539 = vmatprep.subr.bf16.mxu0 0
        %1540 = vmatpush1.bf16.msra.mxu0 0
        %1541 = vmatprep.subr.bf16.mxu0 0
        %1542 = vmatpush1.bf16.msra.mxu0 0
        %1543 = vmatprep.mubr.bf16.mxu0 0
        %1544 = vmatmul.mubr.bf16.gmra.mrb[0].mxu0 %v1506
        %v1545 = vpop.f32.mrb[0].mxu0
        %v1546 = vadd.f32 0.0, %v1545
        %v1547 = vpop.f32.mrb[0].mxu0
        %v1548 = vpop.f32.mrb[0].mxu0
        %v1549 = vpop.f32.mrb[0].mxu0
        %1550 = vdwg.mxu0
        %v1551 = vrcp.pop %v1501
        %v1552 = vmul.f32 %v1546, %v1551
        %v1553 = vpack.c.bf16 %v1552, %v1552
        %v1555 = vunpack.c.l.b16 %v1553
        %v1556 = vpack.c.b16 %v1555, %v1555
        %1557 = vrot.lane.b32.xlu0 %v1556, 64
        %v1558 = vpop.permute.xlu0 %1557
        %vm1560 = vcmask 781824
        %1561 = vst.msk [vmem:[#allocation2] sm:$0xf] %vm1560, %v1558
        %1562 = vrot.lane.b32.xlu0 %v703, 32
        %v1563 = vpop.permute.xlu0 %1562
        %1564 = vrot.lane.b32.xlu0 %v955, 32
        %v1565 = vpop.permute.xlu0 %1564
        %v1567 = vsel %vm1211, %v1563, 0
        %v1570 = vsel %vm1211, %v1565, 0
        %1572 = vmatprep.subr.bf16.mxu0 0
        %1573 = vmatpush1.bf16.xpose.msra.mxu0 %v1570
        %1574 = vmatprep.subr.bf16.mxu0 0
        %1575 = vmatpush1.bf16.xpose.msra.mxu0 0
        %1576 = vmatprep.subr.bf16.mxu0 0
        %1577 = vmatpush1.bf16.xpose.msra.mxu0 0
        %1578 = vmatprep.subr.bf16.mxu0 0
        %1579 = vmatpush1.bf16.xpose.msra.mxu0 0
        %1580 = vmatprep.subr.bf16.mxu0 0
        %1581 = vmatpush1.bf16.xpose.msra.mxu0 0
        %1582 = vmatprep.subr.bf16.mxu0 0
        %1583 = vmatpush1.bf16.xpose.msra.mxu0 0
        %1584 = vmatprep.subr.bf16.mxu0 0
        %1585 = vmatpush1.bf16.xpose.msra.mxu0 0
        %1586 = vmatprep.subr.bf16.mxu0 0
        %1587 = vmatpush1.bf16.xpose.msra.mxu0 0
        %1588 = vmatprep.subr.bf16.mxu0 0
        %1589 = vmatpush1.bf16.xpose.msra.mxu0 0
        %1590 = vmatprep.subr.bf16.mxu0 0
        %1591 = vmatpush1.bf16.xpose.msra.mxu0 0
        %1592 = vmatprep.subr.bf16.mxu0 0
        %1593 = vmatpush1.bf16.xpose.msra.mxu0 0
        %1594 = vmatprep.subr.bf16.mxu0 0
        %1595 = vmatpush1.bf16.xpose.msra.mxu0 0
        %1596 = vmatprep.subr.bf16.mxu0 0
        %1597 = vmatpush1.bf16.xpose.msra.mxu0 0
        %1598 = vmatprep.subr.bf16.mxu0 0
        %1599 = vmatpush1.bf16.xpose.msra.mxu0 0
        %1600 = vmatprep.subr.bf16.mxu0 0
        %1601 = vmatpush1.bf16.xpose.msra.mxu0 0
        %1602 = vmatprep.subr.bf16.mxu0 0
        %1603 = vmatpush1.bf16.xpose.msra.mxu0 0
        %1604 = vmatprep.mubr.bf16.mxu0 0
        %1605 = vmatmul.mubr.bf16.gmra.mrb[0].mxu0 %v1567
        %v1606 = vpop.f32.mrb[0].mxu0
        %v1607 = vadd.f32 0.0, %v1606
        %v1608 = vpop.f32.mrb[0].mxu0
        %v1609 = vpop.f32.mrb[0].mxu0
        %v1610 = vpop.f32.mrb[0].mxu0
        %1611 = vdwg.mxu0
        %v1612 = vsel %vm1258, %v1607, -inf
        %1613 = vmax.xlane.f32.xlu0 %v1612
        %v1614 = vpop.xlane.xlu0 %1613
        %v1615 = vsub.f32 %v1607, %v1614
        %v1616 = vmul.f32 %v1615, 1.442695
        %v1617 = vpow.pop %v1616
        %v1618 = vsel %vm1258, %v1617, 0.0
        %1619 = vadd.xlane.f32.xlu0 %v1618
        %v1620 = vpop.xlane.xlu0 %1619
        %v1621 = vpack.c.bf16 %v1617, %v1617
        %1622 = vrot.lane.b32.xlu0 %v1207, 32
        %v1623 = vpop.permute.xlu0 %1622
        %v1625 = vsel %vm1258, %v1621, 0
        %v1628 = vsel %vm1272, %v1623, 0
        %1630 = vmatprep.subr.bf16.mxu0 0
        %1631 = vmatpush1.bf16.msra.mxu0 %v1628
        %1632 = vmatprep.subr.bf16.mxu0 0
        %1633 = vmatpush1.bf16.msra.mxu0 0
        %1634 = vmatprep.subr.bf16.mxu0 0
        %1635 = vmatpush1.bf16.msra.mxu0 0
        %1636 = vmatprep.subr.bf16.mxu0 0
        %1637 = vmatpush1.bf16.msra.mxu0 0
        %1638 = vmatprep.subr.bf16.mxu0 0
        %1639 = vmatpush1.bf16.msra.mxu0 0
        %1640 = vmatprep.subr.bf16.mxu0 0
        %1641 = vmatpush1.bf16.msra.mxu0 0
        %1642 = vmatprep.subr.bf16.mxu0 0
        %1643 = vmatpush1.bf16.msra.mxu0 0
        %1644 = vmatprep.subr.bf16.mxu0 0
        %1645 = vmatpush1.bf16.msra.mxu0 0
        %1646 = vmatprep.subr.bf16.mxu0 0
        %1647 = vmatpush1.bf16.msra.mxu0 0
        %1648 = vmatprep.subr.bf16.mxu0 0
        %1649 = vmatpush1.bf16.msra.mxu0 0
        %1650 = vmatprep.subr.bf16.mxu0 0
        %1651 = vmatpush1.bf16.msra.mxu0 0
        %1652 = vmatprep.subr.bf16.mxu0 0
        %1653 = vmatpush1.bf16.msra.mxu0 0
        %1654 = vmatprep.subr.bf16.mxu0 0
        %1655 = vmatpush1.bf16.msra.mxu0 0
        %1656 = vmatprep.subr.bf16.mxu0 0
        %1657 = vmatpush1.bf16.msra.mxu0 0
        %1658 = vmatprep.subr.bf16.mxu0 0
        %1659 = vmatpush1.bf16.msra.mxu0 0
        %1660 = vmatprep.subr.bf16.mxu0 0
        %1661 = vmatpush1.bf16.msra.mxu0 0
        %1662 = vmatprep.mubr.bf16.mxu0 0
        %1663 = vmatmul.mubr.bf16.gmra.mrb[0].mxu0 %v1625
        %v1664 = vpop.f32.mrb[0].mxu0
        %v1665 = vadd.f32 0.0, %v1664
        %v1666 = vpop.f32.mrb[0].mxu0
        %v1667 = vpop.f32.mrb[0].mxu0
        %v1668 = vpop.f32.mrb[0].mxu0
        %1669 = vdwg.mxu0
        %v1670 = vrcp.pop %v1620
        %v1671 = vmul.f32 %v1665, %v1670
        %v1672 = vpack.c.bf16 %v1671, %v1671
        %v1674 = vunpack.c.l.b16 %v1672
        %v1675 = vpack.c.b16 %v1674, %v1674
        %1676 = vrot.lane.b32.xlu0 %v1675, 96
        %v1677 = vpop.permute.xlu0 %1676
        %vm1679 = vcmask 1044224
        %1680 = vst.msk [vmem:[#allocation2] sm:$0xf] %vm1679, %v1677
        %v1682 = vsel %vm1211, %v704, 0
        %v1685 = vsel %vm1211, %v956, 0
        %1687 = vmatprep.subr.bf16.mxu0 0
        %1688 = vmatpush1.bf16.xpose.msra.mxu0 %v1685
        %1689 = vmatprep.subr.bf16.mxu0 0
        %1690 = vmatpush1.bf16.xpose.msra.mxu0 0
        %1691 = vmatprep.subr.bf16.mxu0 0
        %1692 = vmatpush1.bf16.xpose.msra.mxu0 0
        %1693 = vmatprep.subr.bf16.mxu0 0
        %1694 = vmatpush1.bf16.xpose.msra.mxu0 0
        %1695 = vmatprep.subr.bf16.mxu0 0
        %1696 = vmatpush1.bf16.xpose.msra.mxu0 0
        %1697 = vmatprep.subr.bf16.mxu0 0
        %1698 = vmatpush1.bf16.xpose.msra.mxu0 0
        %1699 = vmatprep.subr.bf16.mxu0 0
        %1700 = vmatpush1.bf16.xpose.msra.mxu0 0
        %1701 = vmatprep.subr.bf16.mxu0 0
        %1702 = vmatpush1.bf16.xpose.msra.mxu0 0
        %1703 = vmatprep.subr.bf16.mxu0 0
        %1704 = vmatpush1.bf16.xpose.msra.mxu0 0
        %1705 = vmatprep.subr.bf16.mxu0 0
        %1706 = vmatpush1.bf16.xpose.msra.mxu0 0
        %1707 = vmatprep.subr.bf16.mxu0 0
        %1708 = vmatpush1.bf16.xpose.msra.mxu0 0
        %1709 = vmatprep.subr.bf16.mxu0 0
        %1710 = vmatpush1.bf16.xpose.msra.mxu0 0
        %1711 = vmatprep.subr.bf16.mxu0 0
        %1712 = vmatpush1.bf16.xpose.msra.mxu0 0
        %1713 = vmatprep.subr.bf16.mxu0 0
        %1714 = vmatpush1.bf16.xpose.msra.mxu0 0
        %1715 = vmatprep.subr.bf16.mxu0 0
        %1716 = vmatpush1.bf16.xpose.msra.mxu0 0
        %1717 = vmatprep.subr.bf16.mxu0 0
        %1718 = vmatpush1.bf16.xpose.msra.mxu0 0
        %1719 = vmatprep.mubr.bf16.mxu0 0
        %1720 = vmatmul.mubr.bf16.gmra.mrb[0].mxu0 %v1682
        %v1721 = vpop.f32.mrb[0].mxu0
        %v1722 = vadd.f32 0.0, %v1721
        %v1723 = vpop.f32.mrb[0].mxu0
        %v1724 = vpop.f32.mrb[0].mxu0
        %v1725 = vpop.f32.mrb[0].mxu0
        %1726 = vdwg.mxu0
        %v1727 = vsel %vm1258, %v1722, -inf
        %1728 = vmax.xlane.f32.xlu0 %v1727
        %v1729 = vpop.xlane.xlu0 %1728
        %v1730 = vsub.f32 %v1722, %v1729
        %v1731 = vmul.f32 %v1730, 1.442695
        %v1732 = vpow.pop %v1731
        %v1733 = vsel %vm1258, %v1732, 0.0
        %1734 = vadd.xlane.f32.xlu0 %v1733
        %v1735 = vpop.xlane.xlu0 %1734
        %v1736 = vpack.c.bf16 %v1732, %v1732
        %v1738 = vsel %vm1258, %v1736, 0
        %v1741 = vsel %vm1272, %v1208, 0
        %1743 = vmatprep.subr.bf16.mxu0 0
        %1744 = vmatpush1.bf16.msra.mxu0 %v1741
        %1745 = vmatprep.subr.bf16.mxu0 0
        %1746 = vmatpush1.bf16.msra.mxu0 0
        %1747 = vmatprep.subr.bf16.mxu0 0
        %1748 = vmatpush1.bf16.msra.mxu0 0
        %1749 = vmatprep.subr.bf16.mxu0 0
        %1750 = vmatpush1.bf16.msra.mxu0 0
        %1751 = vmatprep.subr.bf16.mxu0 0
        %1752 = vmatpush1.bf16.msra.mxu0 0
        %1753 = vmatprep.subr.bf16.mxu0 0
        %1754 = vmatpush1.bf16.msra.mxu0 0
        %1755 = vmatprep.subr.bf16.mxu0 0
        %1756 = vmatpush1.bf16.msra.mxu0 0
        %1757 = vmatprep.subr.bf16.mxu0 0
        %1758 = vmatpush1.bf16.msra.mxu0 0
        %1759 = vmatprep.subr.bf16.mxu0 0
        %1760 = vmatpush1.bf16.msra.mxu0 0
        %1761 = vmatprep.subr.bf16.mxu0 0
        %1762 = vmatpush1.bf16.msra.mxu0 0
        %1763 = vmatprep.subr.bf16.mxu0 0
        %1764 = vmatpush1.bf16.msra.mxu0 0
        %1765 = vmatprep.subr.bf16.mxu0 0
        %1766 = vmatpush1.bf16.msra.mxu0 0
        %1767 = vmatprep.subr.bf16.mxu0 0
        %1768 = vmatpush1.bf16.msra.mxu0 0
        %1769 = vmatprep.subr.bf16.mxu0 0
        %1770 = vmatpush1.bf16.msra.mxu0 0
        %1771 = vmatprep.subr.bf16.mxu0 0
        %1772 = vmatpush1.bf16.msra.mxu0 0
        %1773 = vmatprep.subr.bf16.mxu0 0
        %1774 = vmatpush1.bf16.msra.mxu0 0
        %1775 = vmatprep.mubr.bf16.mxu0 0
        %1776 = vmatmul.mubr.bf16.gmra.mrb[0].mxu0 %v1738
        %v1777 = vpop.f32.mrb[0].mxu0
        %v1778 = vadd.f32 0.0, %v1777
        %v1779 = vpop.f32.mrb[0].mxu0
        %v1780 = vpop.f32.mrb[0].mxu0
        %v1781 = vpop.f32.mrb[0].mxu0
        %1782 = vdwg.mxu0
        %v1783 = vrcp.pop %v1735
        %v1784 = vmul.f32 %v1778, %v1783
        %v1785 = vpack.c.bf16 %v1784, %v1784
        %1786 = vst.msk [vmem:[#allocation2 + $0x4] sm:$0xf] %vm1319, %v1785
        %1788 = vrot.lane.b32.xlu0 %v704, 96
        %v1789 = vpop.permute.xlu0 %1788
        %1791 = vrot.lane.b32.xlu0 %v956, 96
        %v1792 = vpop.permute.xlu0 %1791
        %v1794 = vsel %vm1211, %v1789, 0
        %v1797 = vsel %vm1211, %v1792, 0
        %1799 = vmatprep.subr.bf16.mxu0 0
        %1800 = vmatpush1.bf16.xpose.msra.mxu0 %v1797
        %1801 = vmatprep.subr.bf16.mxu0 0
        %1802 = vmatpush1.bf16.xpose.msra.mxu0 0
        %1803 = vmatprep.subr.bf16.mxu0 0
        %1804 = vmatpush1.bf16.xpose.msra.mxu0 0
        %1805 = vmatprep.subr.bf16.mxu0 0
        %1806 = vmatpush1.bf16.xpose.msra.mxu0 0
        %1807 = vmatprep.subr.bf16.mxu0 0
        %1808 = vmatpush1.bf16.xpose.msra.mxu0 0
        %1809 = vmatprep.subr.bf16.mxu0 0
        %1810 = vmatpush1.bf16.xpose.msra.mxu0 0
        %1811 = vmatprep.subr.bf16.mxu0 0
        %1812 = vmatpush1.bf16.xpose.msra.mxu0 0
        %1813 = vmatprep.subr.bf16.mxu0 0
        %1814 = vmatpush1.bf16.xpose.msra.mxu0 0
        %1815 = vmatprep.subr.bf16.mxu0 0
        %1816 = vmatpush1.bf16.xpose.msra.mxu0 0
        %1817 = vmatprep.subr.bf16.mxu0 0
        %1818 = vmatpush1.bf16.xpose.msra.mxu0 0
        %1819 = vmatprep.subr.bf16.mxu0 0
        %1820 = vmatpush1.bf16.xpose.msra.mxu0 0
        %1821 = vmatprep.subr.bf16.mxu0 0
        %1822 = vmatpush1.bf16.xpose.msra.mxu0 0
        %1823 = vmatprep.subr.bf16.mxu0 0
        %1824 = vmatpush1.bf16.xpose.msra.mxu0 0
        %1825 = vmatprep.subr.bf16.mxu0 0
        %1826 = vmatpush1.bf16.xpose.msra.mxu0 0
        %1827 = vmatprep.subr.bf16.mxu0 0
        %1828 = vmatpush1.bf16.xpose.msra.mxu0 0
        %1829 = vmatprep.subr.bf16.mxu0 0
        %1830 = vmatpush1.bf16.xpose.msra.mxu0 0
        %1831 = vmatprep.mubr.bf16.mxu0 0
        %1832 = vmatmul.mubr.bf16.gmra.mrb[0].mxu0 %v1794
        %v1833 = vpop.f32.mrb[0].mxu0
        %v1834 = vadd.f32 0.0, %v1833
        %v1835 = vpop.f32.mrb[0].mxu0
        %v1836 = vpop.f32.mrb[0].mxu0
        %v1837 = vpop.f32.mrb[0].mxu0
        %1838 = vdwg.mxu0
        %v1839 = vsel %vm1258, %v1834, -inf
        %1840 = vmax.xlane.f32.xlu0 %v1839
        %v1841 = vpop.xlane.xlu0 %1840
        %v1842 = vsub.f32 %v1834, %v1841
        %v1843 = vmul.f32 %v1842, 1.442695
        %v1844 = vpow.pop %v1843
        %v1845 = vsel %vm1258, %v1844, 0.0
        %1846 = vadd.xlane.f32.xlu0 %v1845
        %v1847 = vpop.xlane.xlu0 %1846
        %v1848 = vpack.c.bf16 %v1844, %v1844
        %1850 = vrot.lane.b32.xlu0 %v1208, 96
        %v1851 = vpop.permute.xlu0 %1850
        %v1853 = vsel %vm1258, %v1848, 0
        %v1856 = vsel %vm1272, %v1851, 0
        %1858 = vmatprep.subr.bf16.mxu0 0
        %1859 = vmatpush1.bf16.msra.mxu0 %v1856
        %1860 = vmatprep.subr.bf16.mxu0 0
        %1861 = vmatpush1.bf16.msra.mxu0 0
        %1862 = vmatprep.subr.bf16.mxu0 0
        %1863 = vmatpush1.bf16.msra.mxu0 0
        %1864 = vmatprep.subr.bf16.mxu0 0
        %1865 = vmatpush1.bf16.msra.mxu0 0
        %1866 = vmatprep.subr.bf16.mxu0 0
        %1867 = vmatpush1.bf16.msra.mxu0 0
        %1868 = vmatprep.subr.bf16.mxu0 0
        %1869 = vmatpush1.bf16.msra.mxu0 0
        %1870 = vmatprep.subr.bf16.mxu0 0
        %1871 = vmatpush1.bf16.msra.mxu0 0
        %1872 = vmatprep.subr.bf16.mxu0 0
        %1873 = vmatpush1.bf16.msra.mxu0 0
        %1874 = vmatprep.subr.bf16.mxu0 0
        %1875 = vmatpush1.bf16.msra.mxu0 0
        %1876 = vmatprep.subr.bf16.mxu0 0
        %1877 = vmatpush1.bf16.msra.mxu0 0
        %1878 = vmatprep.subr.bf16.mxu0 0
        %1879 = vmatpush1.bf16.msra.mxu0 0
        %1880 = vmatprep.subr.bf16.mxu0 0
        %1881 = vmatpush1.bf16.msra.mxu0 0
        %1882 = vmatprep.subr.bf16.mxu0 0
        %1883 = vmatpush1.bf16.msra.mxu0 0
        %1884 = vmatprep.subr.bf16.mxu0 0
        %1885 = vmatpush1.bf16.msra.mxu0 0
        %1886 = vmatprep.subr.bf16.mxu0 0
        %1887 = vmatpush1.bf16.msra.mxu0 0
        %1888 = vmatprep.subr.bf16.mxu0 0
        %1889 = vmatpush1.bf16.msra.mxu0 0
        %1890 = vmatprep.mubr.bf16.mxu0 0
        %1891 = vmatmul.mubr.bf16.gmra.mrb[0].mxu0 %v1853
        %v1892 = vpop.f32.mrb[0].mxu0
        %v1893 = vadd.f32 0.0, %v1892
        %v1894 = vpop.f32.mrb[0].mxu0
        %v1895 = vpop.f32.mrb[0].mxu0
        %v1896 = vpop.f32.mrb[0].mxu0
        %1897 = vdwg.mxu0
        %v1898 = vrcp.pop %v1847
        %v1899 = vmul.f32 %v1893, %v1898
        %v1900 = vpack.c.bf16 %v1899, %v1899
        %v1902 = vunpack.c.l.b16 %v1900
        %v1903 = vpack.c.b16 %v1902, %v1902
        %1904 = vrot.lane.b32.xlu0 %v1903, 32
        %v1905 = vpop.permute.xlu0 %1904
        %1907 = vst.msk [vmem:[#allocation2 + $0x4] sm:$0xf] %vm1441, %v1905
        %1908 = vrot.lane.b32.xlu0 %v704, 64
        %v1909 = vpop.permute.xlu0 %1908
        %1910 = vrot.lane.b32.xlu0 %v956, 64
        %v1911 = vpop.permute.xlu0 %1910
        %v1913 = vsel %vm1211, %v1909, 0
        %v1916 = vsel %vm1211, %v1911, 0
        %1918 = vmatprep.subr.bf16.mxu0 0
        %1919 = vmatpush1.bf16.xpose.msra.mxu0 %v1916
        %1920 = vmatprep.subr.bf16.mxu0 0
        %1921 = vmatpush1.bf16.xpose.msra.mxu0 0
        %1922 = vmatprep.subr.bf16.mxu0 0
        %1923 = vmatpush1.bf16.xpose.msra.mxu0 0
        %1924 = vmatprep.subr.bf16.mxu0 0
        %1925 = vmatpush1.bf16.xpose.msra.mxu0 0
        %1926 = vmatprep.subr.bf16.mxu0 0
        %1927 = vmatpush1.bf16.xpose.msra.mxu0 0
        %1928 = vmatprep.subr.bf16.mxu0 0
        %1929 = vmatpush1.bf16.xpose.msra.mxu0 0
        %1930 = vmatprep.subr.bf16.mxu0 0
        %1931 = vmatpush1.bf16.xpose.msra.mxu0 0
        %1932 = vmatprep.subr.bf16.mxu0 0
        %1933 = vmatpush1.bf16.xpose.msra.mxu0 0
        %1934 = vmatprep.subr.bf16.mxu0 0
        %1935 = vmatpush1.bf16.xpose.msra.mxu0 0
        %1936 = vmatprep.subr.bf16.mxu0 0
        %1937 = vmatpush1.bf16.xpose.msra.mxu0 0
        %1938 = vmatprep.subr.bf16.mxu0 0
        %1939 = vmatpush1.bf16.xpose.msra.mxu0 0
        %1940 = vmatprep.subr.bf16.mxu0 0
        %1941 = vmatpush1.bf16.xpose.msra.mxu0 0
        %1942 = vmatprep.subr.bf16.mxu0 0
        %1943 = vmatpush1.bf16.xpose.msra.mxu0 0
        %1944 = vmatprep.subr.bf16.mxu0 0
        %1945 = vmatpush1.bf16.xpose.msra.mxu0 0
        %1946 = vmatprep.subr.bf16.mxu0 0
        %1947 = vmatpush1.bf16.xpose.msra.mxu0 0
        %1948 = vmatprep.subr.bf16.mxu0 0
        %1949 = vmatpush1.bf16.xpose.msra.mxu0 0
        %1950 = vmatprep.mubr.bf16.mxu0 0
        %1951 = vmatmul.mubr.bf16.gmra.mrb[0].mxu0 %v1913
        %v1952 = vpop.f32.mrb[0].mxu0
        %v1953 = vadd.f32 0.0, %v1952
        %v1954 = vpop.f32.mrb[0].mxu0
        %v1955 = vpop.f32.mrb[0].mxu0
        %v1956 = vpop.f32.mrb[0].mxu0
        %1957 = vdwg.mxu0
        %v1958 = vsel %vm1258, %v1953, -inf
        %1959 = vmax.xlane.f32.xlu0 %v1958
        %v1960 = vpop.xlane.xlu0 %1959
        %v1961 = vsub.f32 %v1953, %v1960
        %v1962 = vmul.f32 %v1961, 1.442695
        %v1963 = vpow.pop %v1962
        %v1964 = vsel %vm1258, %v1963, 0.0
        %1965 = vadd.xlane.f32.xlu0 %v1964
        %v1966 = vpop.xlane.xlu0 %1965
        %v1967 = vpack.c.bf16 %v1963, %v1963
        %1968 = vrot.lane.b32.xlu0 %v1208, 64
        %v1969 = vpop.permute.xlu0 %1968
        %v1971 = vsel %vm1258, %v1967, 0
        %v1974 = vsel %vm1272, %v1969, 0
        %1976 = vmatprep.subr.bf16.mxu0 0
        %1977 = vmatpush1.bf16.msra.mxu0 %v1974
        %1978 = vmatprep.subr.bf16.mxu0 0
        %1979 = vmatpush1.bf16.msra.mxu0 0
        %1980 = vmatprep.subr.bf16.mxu0 0
        %1981 = vmatpush1.bf16.msra.mxu0 0
        %1982 = vmatprep.subr.bf16.mxu0 0
        %1983 = vmatpush1.bf16.msra.mxu0 0
        %1984 = vmatprep.subr.bf16.mxu0 0
        %1985 = vmatpush1.bf16.msra.mxu0 0
        %1986 = vmatprep.subr.bf16.mxu0 0
        %1987 = vmatpush1.bf16.msra.mxu0 0
        %1988 = vmatprep.subr.bf16.mxu0 0
        %1989 = vmatpush1.bf16.msra.mxu0 0
        %1990 = vmatprep.subr.bf16.mxu0 0
        %1991 = vmatpush1.bf16.msra.mxu0 0
        %1992 = vmatprep.subr.bf16.mxu0 0
        %1993 = vmatpush1.bf16.msra.mxu0 0
        %1994 = vmatprep.subr.bf16.mxu0 0
        %1995 = vmatpush1.bf16.msra.mxu0 0
        %1996 = vmatprep.subr.bf16.mxu0 0
        %1997 = vmatpush1.bf16.msra.mxu0 0
        %1998 = vmatprep.subr.bf16.mxu0 0
        %1999 = vmatpush1.bf16.msra.mxu0 0
        %2000 = vmatprep.subr.bf16.mxu0 0
        %2001 = vmatpush1.bf16.msra.mxu0 0
        %2002 = vmatprep.subr.bf16.mxu0 0
        %2003 = vmatpush1.bf16.msra.mxu0 0
        %2004 = vmatprep.subr.bf16.mxu0 0
        %2005 = vmatpush1.bf16.msra.mxu0 0
        %2006 = vmatprep.subr.bf16.mxu0 0
        %2007 = vmatpush1.bf16.msra.mxu0 0
        %2008 = vmatprep.mubr.bf16.mxu0 0
        %2009 = vmatmul.mubr.bf16.gmra.mrb[0].mxu0 %v1971
        %v2010 = vpop.f32.mrb[0].mxu0
        %v2011 = vadd.f32 0.0, %v2010
        %v2012 = vpop.f32.mrb[0].mxu0
        %v2013 = vpop.f32.mrb[0].mxu0
        %v2014 = vpop.f32.mrb[0].mxu0
        %2015 = vdwg.mxu0
        %v2016 = vrcp.pop %v1966
        %v2017 = vmul.f32 %v2011, %v2016
        %v2018 = vpack.c.bf16 %v2017, %v2017
        %v2020 = vunpack.c.l.b16 %v2018
        %v2021 = vpack.c.b16 %v2020, %v2020
        %2022 = vrot.lane.b32.xlu0 %v2021, 64
        %v2023 = vpop.permute.xlu0 %2022
        %2025 = vst.msk [vmem:[#allocation2 + $0x4] sm:$0xf] %vm1560, %v2023
        %2026 = vrot.lane.b32.xlu0 %v704, 32
        %v2027 = vpop.permute.xlu0 %2026
        %2028 = vrot.lane.b32.xlu0 %v956, 32
        %v2029 = vpop.permute.xlu0 %2028
        %v2031 = vsel %vm1211, %v2027, 0
        %v2034 = vsel %vm1211, %v2029, 0
        %2036 = vmatprep.subr.bf16.mxu0 0
        %2037 = vmatpush1.bf16.xpose.msra.mxu0 %v2034
        %2038 = vmatprep.subr.bf16.mxu0 0
        %2039 = vmatpush1.bf16.xpose.msra.mxu0 0
        %2040 = vmatprep.subr.bf16.mxu0 0
        %2041 = vmatpush1.bf16.xpose.msra.mxu0 0
        %2042 = vmatprep.subr.bf16.mxu0 0
        %2043 = vmatpush1.bf16.xpose.msra.mxu0 0
        %2044 = vmatprep.subr.bf16.mxu0 0
        %2045 = vmatpush1.bf16.xpose.msra.mxu0 0
        %2046 = vmatprep.subr.bf16.mxu0 0
        %2047 = vmatpush1.bf16.xpose.msra.mxu0 0
        %2048 = vmatprep.subr.bf16.mxu0 0
        %2049 = vmatpush1.bf16.xpose.msra.mxu0 0
        %2050 = vmatprep.subr.bf16.mxu0 0
        %2051 = vmatpush1.bf16.xpose.msra.mxu0 0
        %2052 = vmatprep.subr.bf16.mxu0 0
        %2053 = vmatpush1.bf16.xpose.msra.mxu0 0
        %2054 = vmatprep.subr.bf16.mxu0 0
        %2055 = vmatpush1.bf16.xpose.msra.mxu0 0
        %2056 = vmatprep.subr.bf16.mxu0 0
        %2057 = vmatpush1.bf16.xpose.msra.mxu0 0
        %2058 = vmatprep.subr.bf16.mxu0 0
        %2059 = vmatpush1.bf16.xpose.msra.mxu0 0
        %2060 = vmatprep.subr.bf16.mxu0 0
        %2061 = vmatpush1.bf16.xpose.msra.mxu0 0
        %2062 = vmatprep.subr.bf16.mxu0 0
        %2063 = vmatpush1.bf16.xpose.msra.mxu0 0
        %2064 = vmatprep.subr.bf16.mxu0 0
        %2065 = vmatpush1.bf16.xpose.msra.mxu0 0
        %2066 = vmatprep.subr.bf16.mxu0 0
        %2067 = vmatpush1.bf16.xpose.msra.mxu0 0
        %2068 = vmatprep.mubr.bf16.mxu0 0
        %2069 = vmatmul.mubr.bf16.gmra.mrb[0].mxu0 %v2031
        %v2070 = vpop.f32.mrb[0].mxu0
        %v2071 = vadd.f32 0.0, %v2070
        %v2072 = vpop.f32.mrb[0].mxu0
        %v2073 = vpop.f32.mrb[0].mxu0
        %v2074 = vpop.f32.mrb[0].mxu0
        %2075 = vdwg.mxu0
        %v2076 = vsel %vm1258, %v2071, -inf
        %2077 = vmax.xlane.f32.xlu0 %v2076
        %v2078 = vpop.xlane.xlu0 %2077
        %v2079 = vsub.f32 %v2071, %v2078
        %v2080 = vmul.f32 %v2079, 1.442695
        %v2081 = vpow.pop %v2080
        %v2082 = vsel %vm1258, %v2081, 0.0
        %2083 = vadd.xlane.f32.xlu0 %v2082
        %v2084 = vpop.xlane.xlu0 %2083
        %v2085 = vpack.c.bf16 %v2081, %v2081
        %2086 = vrot.lane.b32.xlu0 %v1208, 32
        %v2087 = vpop.permute.xlu0 %2086
        %v2089 = vsel %vm1258, %v2085, 0
        %v2092 = vsel %vm1272, %v2087, 0
        %2094 = vmatprep.subr.bf16.mxu0 0
        %2095 = vmatpush1.bf16.msra.mxu0 %v2092
        %2096 = vmatprep.subr.bf16.mxu0 0
        %2097 = vmatpush1.bf16.msra.mxu0 0
        %2098 = vmatprep.subr.bf16.mxu0 0
        %2099 = vmatpush1.bf16.msra.mxu0 0
        %2100 = vmatprep.subr.bf16.mxu0 0
        %2101 = vmatpush1.bf16.msra.mxu0 0
        %2102 = vmatprep.subr.bf16.mxu0 0
        %2103 = vmatpush1.bf16.msra.mxu0 0
        %2104 = vmatprep.subr.bf16.mxu0 0
        %2105 = vmatpush1.bf16.msra.mxu0 0
        %2106 = vmatprep.subr.bf16.mxu0 0
        %2107 = vmatpush1.bf16.msra.mxu0 0
        %2108 = vmatprep.subr.bf16.mxu0 0
        %2109 = vmatpush1.bf16.msra.mxu0 0
        %2110 = vmatprep.subr.bf16.mxu0 0
        %2111 = vmatpush1.bf16.msra.mxu0 0
        %2112 = vmatprep.subr.bf16.mxu0 0
        %2113 = vmatpush1.bf16.msra.mxu0 0
        %2114 = vmatprep.subr.bf16.mxu0 0
        %2115 = vmatpush1.bf16.msra.mxu0 0
        %2116 = vmatprep.subr.bf16.mxu0 0
        %2117 = vmatpush1.bf16.msra.mxu0 0
        %2118 = vmatprep.subr.bf16.mxu0 0
        %2119 = vmatpush1.bf16.msra.mxu0 0
        %2120 = vmatprep.subr.bf16.mxu0 0
        %2121 = vmatpush1.bf16.msra.mxu0 0
        %2122 = vmatprep.subr.bf16.mxu0 0
        %2123 = vmatpush1.bf16.msra.mxu0 0
        %2124 = vmatprep.subr.bf16.mxu0 0
        %2125 = vmatpush1.bf16.msra.mxu0 0
        %2126 = vmatprep.mubr.bf16.mxu0 0
        %2127 = vmatmul.mubr.bf16.gmra.mrb[0].mxu0 %v2089
        %v2128 = vpop.f32.mrb[0].mxu0
        %v2129 = vadd.f32 0.0, %v2128
        %v2130 = vpop.f32.mrb[0].mxu0
        %v2131 = vpop.f32.mrb[0].mxu0
        %v2132 = vpop.f32.mrb[0].mxu0
        %2133 = vdwg.mxu0
        %v2134 = vrcp.pop %v2084
        %v2135 = vmul.f32 %v2129, %v2134
        %v2136 = vpack.c.bf16 %v2135, %v2135
        %v2138 = vunpack.c.l.b16 %v2136
        %v2139 = vpack.c.b16 %v2138, %v2138
        %2140 = vrot.lane.b32.xlu0 %v2139, 96
        %v2141 = vpop.permute.xlu0 %2140
        %2143 = vst.msk [vmem:[#allocation2 + $0x4] sm:$0xf] %vm1679, %v2141
        %v2144 = vld [vmem:[#allocation2] sm:$0xff]
        %v2145 = vld [vmem:[#allocation14] sm:$0xff]
        %v2146 = vld [vmem:[#allocation14 + $0x8] sm:$0xff]
        %v2147 = vld [vmem:[#allocation14 + $0x10] sm:$0xff]
        %v2148 = vld [vmem:[#allocation14 + $0x18] sm:$0xff]
        %v2149 = vld [vmem:[#allocation14 + $0x20] sm:$0xff]
        %v2150 = vld [vmem:[#allocation14 + $0x28] sm:$0xff]
        %v2151 = vld [vmem:[#allocation14 + $0x30] sm:$0xff]
        %v2152 = vld [vmem:[#allocation14 + $0x38] sm:$0xff]
        %v2153 = vld [vmem:[#allocation14 + $0x40] sm:$0xff]
        %v2154 = vld [vmem:[#allocation14 + $0x48] sm:$0xff]
        %v2155 = vld [vmem:[#allocation14 + $0x50] sm:$0xff]
        %v2156 = vld [vmem:[#allocation14 + $0x58] sm:$0xff]
        %v2157 = vld [vmem:[#allocation14 + $0x60] sm:$0xff]
        %v2158 = vld [vmem:[#allocation14 + $0x68] sm:$0xff]
        %v2159 = vld [vmem:[#allocation14 + $0x70] sm:$0xff]
        %v2160 = vld [vmem:[#allocation14 + $0x78] sm:$0xff]
        %v2161 = vld [vmem:[#allocation14 + $0x80] sm:$0xff]
        %v2162 = vld [vmem:[#allocation14 + $0x88] sm:$0xff]
        %v2163 = vld [vmem:[#allocation14 + $0x90] sm:$0xff]
        %v2164 = vld [vmem:[#allocation14 + $0x98] sm:$0xff]
        %v2165 = vld [vmem:[#allocation14 + $0xa0] sm:$0xff]
        %v2166 = vld [vmem:[#allocation14 + $0xa8] sm:$0xff]
        %v2167 = vld [vmem:[#allocation14 + $0xb0] sm:$0xff]
        %v2168 = vld [vmem:[#allocation14 + $0xb8] sm:$0xff]
        %v2169 = vld [vmem:[#allocation14 + $0xc0] sm:$0xff]
        %v2170 = vld [vmem:[#allocation14 + $0xc8] sm:$0xff]
        %v2171 = vld [vmem:[#allocation14 + $0xd0] sm:$0xff]
        %v2172 = vld [vmem:[#allocation14 + $0xd8] sm:$0xff]
        %v2173 = vld [vmem:[#allocation14 + $0xe0] sm:$0xff]
        %v2174 = vld [vmem:[#allocation14 + $0xe8] sm:$0xff]
        %v2175 = vld [vmem:[#allocation14 + $0xf0] sm:$0xff]
        %v2176 = vld [vmem:[#allocation14 + $0xf8] sm:$0xff]
        %v2178 = vlaneseq
        %v2179 = vshrl.u32 %v2178, 7
        %v2180 = vsub.s32 0, %v2179
        %v2181 = vrot.slane %v1210, %v2180
        %v2182 = vlaneseq
        %v2183 = vshrl.u32 %v2182, 7
        %v2184 = vsub.s32 1, %v2183
        %v2185 = vrot.slane %v1210, %v2184
        %v2189 = vunpack.c.l.b16 %v2144
        %v2190 = vunpack.c.h.b16 %v2144
        %v2191 = vpack.c.b16 %v2189, %v2189
        %v2192 = vpack.c.b16 %v2190, %v2190
        %v2227 = vunpack.c.l.b16 %v2145
        %v2228 = vunpack.c.h.b16 %v2145
        %v2229 = vunpack.c.l.b16 %v2146
        %v2230 = vunpack.c.h.b16 %v2146
        %v2231 = vunpack.c.l.b16 %v2147
        %v2232 = vunpack.c.h.b16 %v2147
        %v2233 = vunpack.c.l.b16 %v2148
        %v2234 = vunpack.c.h.b16 %v2148
        %v2235 = vunpack.c.l.b16 %v2149
        %v2236 = vunpack.c.h.b16 %v2149
        %v2237 = vunpack.c.l.b16 %v2150
        %v2238 = vunpack.c.h.b16 %v2150
        %v2239 = vunpack.c.l.b16 %v2151
        %v2240 = vunpack.c.h.b16 %v2151
        %v2241 = vunpack.c.l.b16 %v2152
        %v2242 = vunpack.c.h.b16 %v2152
        %v2243 = vunpack.c.l.b16 %v2153
        %v2244 = vunpack.c.h.b16 %v2153
        %v2245 = vunpack.c.l.b16 %v2154
        %v2246 = vunpack.c.h.b16 %v2154
        %v2247 = vunpack.c.l.b16 %v2155
        %v2248 = vunpack.c.h.b16 %v2155
        %v2249 = vunpack.c.l.b16 %v2156
        %v2250 = vunpack.c.h.b16 %v2156
        %v2251 = vunpack.c.l.b16 %v2157
        %v2252 = vunpack.c.h.b16 %v2157
        %v2253 = vunpack.c.l.b16 %v2158
        %v2254 = vunpack.c.h.b16 %v2158
        %v2255 = vunpack.c.l.b16 %v2159
        %v2256 = vunpack.c.h.b16 %v2159
        %v2257 = vunpack.c.l.b16 %v2160
        %v2258 = vunpack.c.h.b16 %v2160
        %v2259 = vunpack.c.l.b16 %v2161
        %v2260 = vunpack.c.h.b16 %v2161
        %v2261 = vunpack.c.l.b16 %v2162
        %v2262 = vunpack.c.h.b16 %v2162
        %v2263 = vunpack.c.l.b16 %v2163
        %v2264 = vunpack.c.h.b16 %v2163
        %v2265 = vunpack.c.l.b16 %v2164
        %v2266 = vunpack.c.h.b16 %v2164
        %v2267 = vunpack.c.l.b16 %v2165
        %v2268 = vunpack.c.h.b16 %v2165
        %v2269 = vunpack.c.l.b16 %v2166
        %v2270 = vunpack.c.h.b16 %v2166
        %v2271 = vunpack.c.l.b16 %v2167
        %v2272 = vunpack.c.h.b16 %v2167
        %v2273 = vunpack.c.l.b16 %v2168
        %v2274 = vunpack.c.h.b16 %v2168
        %v2275 = vunpack.c.l.b16 %v2169
        %v2276 = vunpack.c.h.b16 %v2169
        %v2277 = vunpack.c.l.b16 %v2170
        %v2278 = vunpack.c.h.b16 %v2170
        %v2279 = vunpack.c.l.b16 %v2171
        %v2280 = vunpack.c.h.b16 %v2171
        %v2281 = vunpack.c.l.b16 %v2172
        %v2282 = vunpack.c.h.b16 %v2172
        %v2283 = vunpack.c.l.b16 %v2173
        %v2284 = vunpack.c.h.b16 %v2173
        %v2285 = vunpack.c.l.b16 %v2174
        %v2286 = vunpack.c.h.b16 %v2174
        %v2287 = vunpack.c.l.b16 %v2175
        %v2288 = vunpack.c.h.b16 %v2175
        %v2289 = vunpack.c.l.b16 %v2176
        %v2290 = vunpack.c.h.b16 %v2176
        %v2291 = vpack.c.b16 %v2229, %v2227
        %v2292 = vpack.c.b16 %v2230, %v2228
        %v2293 = vpack.c.b16 %v2233, %v2231
        %v2294 = vpack.c.b16 %v2234, %v2232
        %v2295 = vpack.c.b16 %v2237, %v2235
        %v2296 = vpack.c.b16 %v2238, %v2236
        %v2297 = vpack.c.b16 %v2241, %v2239
        %v2298 = vpack.c.b16 %v2242, %v2240
        %v2299 = vpack.c.b16 %v2245, %v2243
        %v2300 = vpack.c.b16 %v2246, %v2244
        %v2301 = vpack.c.b16 %v2249, %v2247
        %v2302 = vpack.c.b16 %v2250, %v2248
        %v2303 = vpack.c.b16 %v2253, %v2251
        %v2304 = vpack.c.b16 %v2254, %v2252
        %v2305 = vpack.c.b16 %v2257, %v2255
        %v2306 = vpack.c.b16 %v2258, %v2256
        %v2307 = vpack.c.b16 %v2261, %v2259
        %v2308 = vpack.c.b16 %v2262, %v2260
        %v2309 = vpack.c.b16 %v2265, %v2263
        %v2310 = vpack.c.b16 %v2266, %v2264
        %v2311 = vpack.c.b16 %v2269, %v2267
        %v2312 = vpack.c.b16 %v2270, %v2268
        %v2313 = vpack.c.b16 %v2273, %v2271
        %v2314 = vpack.c.b16 %v2274, %v2272
        %v2315 = vpack.c.b16 %v2277, %v2275
        %v2316 = vpack.c.b16 %v2278, %v2276
        %v2317 = vpack.c.b16 %v2281, %v2279
        %v2318 = vpack.c.b16 %v2282, %v2280
        %v2319 = vpack.c.b16 %v2285, %v2283
        %v2320 = vpack.c.b16 %v2286, %v2284
        %v2321 = vpack.c.b16 %v2289, %v2287
        %v2322 = vpack.c.b16 %v2290, %v2288
        %2355 = vmatprep.subr.bf16.mxu0 %v2292
        %2356 = vmatpush1.bf16.msra.mxu0 %v2291
        %2357 = vmatprep.subr.bf16.mxu0 %v2294
        %2358 = vmatpush1.bf16.msra.mxu0 %v2293
        %2359 = vmatprep.subr.bf16.mxu0 %v2296
        %2360 = vmatpush1.bf16.msra.mxu0 %v2295
        %2361 = vmatprep.subr.bf16.mxu0 %v2298
        %2362 = vmatpush1.bf16.msra.mxu0 %v2297
        %2363 = vmatprep.subr.bf16.mxu0 %v2300
        %2364 = vmatpush1.bf16.msra.mxu0 %v2299
        %2365 = vmatprep.subr.bf16.mxu0 %v2302
        %2366 = vmatpush1.bf16.msra.mxu0 %v2301
        %2367 = vmatprep.subr.bf16.mxu0 %v2304
        %2368 = vmatpush1.bf16.msra.mxu0 %v2303
        %2369 = vmatprep.subr.bf16.mxu0 %v2306
        %2370 = vmatpush1.bf16.msra.mxu0 %v2305
        %2371 = vmatprep.subr.bf16.mxu0 %v2308
        %2372 = vmatpush1.bf16.msra.mxu0 %v2307
        %2373 = vmatprep.subr.bf16.mxu0 %v2310
        %2374 = vmatpush1.bf16.msra.mxu0 %v2309
        %2375 = vmatprep.subr.bf16.mxu0 %v2312
        %2376 = vmatpush1.bf16.msra.mxu0 %v2311
        %2377 = vmatprep.subr.bf16.mxu0 %v2314
        %2378 = vmatpush1.bf16.msra.mxu0 %v2313
        %2379 = vmatprep.subr.bf16.mxu0 %v2316
        %2380 = vmatpush1.bf16.msra.mxu0 %v2315
        %2381 = vmatprep.subr.bf16.mxu0 %v2318
        %2382 = vmatpush1.bf16.msra.mxu0 %v2317
        %2383 = vmatprep.subr.bf16.mxu0 %v2320
        %2384 = vmatpush1.bf16.msra.mxu0 %v2319
        %2385 = vmatprep.subr.bf16.mxu0 %v2322
        %2386 = vmatpush1.bf16.msra.mxu0 %v2321
        %2387 = vmatprep.mubr.bf16.mxu0 %v2192
        %2388 = vmatmul.mubr.bf16.gmra.mrb[0].mxu0 %v2191
        %v2389 = vpop.f32.mrb[0].mxu0
        %v2390 = vadd.f32 %v2181, %v2389
        %v2391 = vpop.f32.mrb[0].mxu0
        %v2392 = vadd.f32 %v2185, %v2391
        %v2393 = vpop.f32.mrb[0].mxu0
        %v2394 = vpop.f32.mrb[0].mxu0
        %2395 = vdwg.mxu0
        %2396 = vst [vmem:[%s452] sm:$0xff] %v2390
        %2397 = vst [vmem:[%s452 + $0x8] sm:$0xff] %v2392
        %s2398 = sand.u32 %s221, 1
        %s2399 = scalar_lea.sflag [#allocation5], %s2398
        %s2400 = sand.u32 %s221, 1
        %s2401 = smul.addr %s2400, 16
        %s2402 = scalar_lea.vmem [#allocation15], %s2401
        // Predicated region
        $region81: #{tpu_custom_call.1} parent=51 // pred_check
          %p2403 = pneg %p231
        $region82: #{tpu_custom_call.1} parent=51 // pred_check_branch
          %2405 = sbr.rel (%p2403) target = $region84
        $region83: #{tpu_custom_call.1} parent=51 // pred_region
          %s2407 = ssub.s32 256, 256
          %2408 = vsyncadd %s2399, %s2407
          %s2409 = smul.addr %s30, 2
          %s2410 = smul.addr %s2409, 128
          %s2411 = scalar_lea.hbm %s8, %s2410
          %s2413 = sshll.u32 %s2402, 4
          %s2414 = int_to_ptr.vmem [resolvable:$true] %s2413
          %2416 = dma.vmem_to_hbm [thread:$0]  %s2414, 256, %s2411, %s2399
        $region84: #{tpu_custom_call.1} parent=51 // pred_fallthru
          _
      $region52: #{tpu_custom_call.1} parent=5 // pred_fallthru
        _
      %p2417 = scmp.le.s32.totalorder 2, %s25
      // Predicated region
      $region85: #{tpu_custom_call.1} parent=5 // pred_check
        %p2418 = pneg %p2417
      $region86: #{tpu_custom_call.1} parent=5 // pred_check_branch
        %2420 = sbr.rel (%p2418) target = $region88
      $region87: #{tpu_custom_call.1} parent=5 // pred_region
        %s2421 = ssub.s32 %s25, 2
        // Predicated region
        $region89: #{tpu_custom_call.1} parent=87 // pred_check
          %p2422 = pneg %p237
        $region90: #{tpu_custom_call.1} parent=87 // pred_check_branch
          %2424 = sbr.rel (%p2422) target = $region92
        $region91: #{tpu_custom_call.1} parent=87 // pred_region
          %s2425 = sand.u32 %s222, 1
          %s2426 = scalar_lea.sflag [#allocation5], %s2425
          %s2427 = sand.u32 %s222, 1
          %s2428 = smul.addr %s2427, 16
          %s2429 = scalar_lea.vmem [#allocation15], %s2428
          %2430 = dma.done %s2426, 256
        $region92: #{tpu_custom_call.1} parent=87 // pred_fallthru
          _
      $region88: #{tpu_custom_call.1} parent=5 // pred_fallthru
        _
    $region6: #{tpu_custom_call.1} parent=1 // loop_footer
      %s29 = sadd.s32 1, %s25
    $region7: #{tpu_custom_call.1} parent=1 // loop_footer_branch
      %24 = sbr.rel target = $region3
    $region8: #{tpu_custom_call.1} parent=1 // loop_exit
      _
    %2431 = vsyncpa [#allocation4], 1
    %s2432 = scalar_lea.sflag [#allocation4], 1
    %2433 = vsyncpa %s2432, 1
    %2434 = vsyncpa [#allocation7], 1
    %s2435 = scalar_lea.sflag [#allocation7], 1
    %2436 = vsyncpa %s2435, 1
    %2437 = vsyncpa [#allocation10], 1
    %2438 = vsyncpa [#allocation13], 1
    %2439 = vsyncpa [#allocation5], 1
    %s2440 = scalar_lea.sflag [#allocation5], 1
    %2441 = vsyncpa %s2440, 1

</llo_original>
